<compile_context>
chip_gen: v7x
topology: tpu7x:2x2x1
jax: 0.10.0
libtpu: 0.0.40
codegen_flags: <defaults>
</compile_context>

<pallas_src>
import functools
import math

import jax
import jax.numpy as jnp
from jax import lax
from jax.experimental import pallas as pl
from jax.experimental.pallas import tpu as pltpu


# -----------------------------------------------------------------------------
# Fused kernel: one batch element per grid step, all heads inside.
# -----------------------------------------------------------------------------
def _fused_attention_kernel(x_ref, wqkv_ref, wout_ref, bout_ref, o_ref, *,
                            heads, dim_head, scale):
    n = x_ref.shape[1]
    dim = x_ref.shape[2]
    inner = heads * dim_head

    x = x_ref[0]                       # (N, DIM)  f32
    wqkv = wqkv_ref[...]               # (DIM, 3*INNER)
    wout = wout_ref[...]               # (INNER, DIM)

    # Single lane-dense MXU projection for q, k, v of every head at once.
    qkv = jnp.dot(x, wqkv, preferred_element_type=jnp.float32)   # (N, 3*INNER)

    # Output accumulator seeded with the bias -> exactly one store at the end,
    # already in the 'b n (h d)'-then-projected (N, DIM) layout.
    acc = jnp.broadcast_to(bout_ref[...].astype(jnp.float32), (n, dim))

    for h in range(heads):             # heads is small & static: unrolled
        lo = h * dim_head
        q = qkv[:, lo:lo + dim_head] * scale          # fold scale into q (N*D mults)
        k = qkv[:, inner + lo:inner + lo + dim_head]
        v = qkv[:, 2 * inner + lo:2 * inner + lo + dim_head]

        # dots = q @ k^T : contract last dims directly, no explicit transpose.
        dots = lax.dot_general(q, k, (((1,), (1,)), ((), ())),
                               preferred_element_type=jnp.float32)  # (N, N)

        # Numerically stable softmax; approx reciprocal runs on the EUP slot.
        m = jnp.max(dots, axis=-1, keepdims=True)
        p = jnp.exp(dots - m)
        denom = jnp.sum(p, axis=-1, keepdims=True)
        attn = p * pl.reciprocal(denom, approx=True)

        out_h = jnp.dot(attn, v, preferred_element_type=jnp.float32)   # (N, D)

        # Fused head-concat + output projection:
        #   concat_h(out_h) @ W_out == sum_h out_h @ W_out[h*D:(h+1)*D, :]
        acc = acc + jnp.dot(out_h, wout[lo:lo + dim_head, :],
                            preferred_element_type=jnp.float32)

    o_ref[0] = acc.astype(o_ref.dtype)


def attention_forward(x, w_qkv, w_out, b_out, *, heads, dim_head):
    b, n, dim = x.shape
    inner = heads * dim_head
    scale = dim_head ** (-0.5)

    kernel = functools.partial(
        _fused_attention_kernel, heads=heads, dim_head=dim_head, scale=scale)

    # Advisory cost estimate so XLA schedules the custom call sensibly.
    flops = b * (2 * n * dim * 3 * inner          # qkv projection
                 + heads * 4 * n * n * dim_head   # q@k^T and attn@v
                 + 2 * n * inner * dim)           # output projection
    transcendentals = b * heads * n * n           # exp in softmax
    bytes_accessed = 4 * (x.size + w_qkv.size + w_out.size + b_out.size
                          + b * n * dim)

    return pl.pallas_call(
        kernel,
        out_shape=jax.ShapeDtypeStruct((b, n, dim), x.dtype),
        grid=(b,),
        in_specs=[
            pl.BlockSpec((1, n, dim), lambda i: (i, 0, 0)),       # x  (per batch)
            pl.BlockSpec((dim, 3 * inner), lambda i: (0, 0)),     # w_qkv (resident)
            pl.BlockSpec((inner, dim), lambda i: (0, 0)),         # w_out (resident)
            pl.BlockSpec((1, dim), lambda i: (0, 0)),             # b_out (resident)
        ],
        out_specs=pl.BlockSpec((1, n, dim), lambda i: (i, 0, 0)),
        compiler_params=pltpu.CompilerParams(
            dimension_semantics=("parallel",)),
        cost_estimate=pl.CostEstimate(
            flops=flops,
            transcendentals=transcendentals,
            bytes_accessed=bytes_accessed),
    )(x, w_qkv, w_out, b_out.reshape(1, dim))


# -----------------------------------------------------------------------------
# Pure-JAX reference (mirrors the PyTorch module's forward)
# -----------------------------------------------------------------------------
def attention_reference(x, w_qkv, w_out, b_out, *, heads, dim_head):
    b, n, dim = x.shape
    inner = heads * dim_head
    scale = dim_head ** (-0.5)
    qkv = x @ w_qkv
    qkv = qkv.reshape(b, n, 3, heads, dim_head)
    qkv = jnp.transpose(qkv, (2, 0, 3, 1, 4))
    q, k, v = qkv[0], qkv[1], qkv[2]
    dots = jnp.einsum("bhid,bhjd->bhij", q, k) * scale
    attn = jax.nn.softmax(dots, axis=-1)
    out = jnp.einsum("bhij,bhjd->bhid", attn, v)
    out = jnp.transpose(out, (0, 2, 1, 3)).reshape(b, n, inner)
    return out @ w_out + b_out


if __name__ == "__main__":
    # Small, module-consistent shapes
    B, N, DIM = 2, 8, 32
    HEADS, DIM_HEAD = 4, 8
    INNER = HEADS * DIM_HEAD

    key = jax.random.PRNGKey(0)
    kx, kqkv, kw, kb = jax.random.split(key, 4)

    x = jax.random.normal(kx, (B, N, DIM), dtype=jnp.float32)

    lim_qkv = 1.0 / math.sqrt(DIM)
    w_qkv = jax.random.uniform(
        kqkv, (DIM, 3 * INNER), minval=-lim_qkv, maxval=lim_qkv, dtype=jnp.float32
    )
    lim_out = 1.0 / math.sqrt(INNER)
    w_out = jax.random.uniform(
        kw, (INNER, DIM), minval=-lim_out, maxval=lim_out, dtype=jnp.float32
    )
    b_out = jax.random.uniform(
        kb, (DIM,), minval=-lim_out, maxval=lim_out, dtype=jnp.float32
    )

    y = attention_forward(x, w_qkv, w_out, b_out, heads=HEADS, dim_head=DIM_HEAD)
    y = jax.block_until_ready(y)

    y_ref = attention_reference(x, w_qkv, w_out, b_out, heads=HEADS, dim_head=DIM_HEAD)
    assert y.shape == (B, N, DIM)
    # Tolerance loosened slightly: approx (EUP) reciprocal in the softmax
    # denominator introduces ~1e-3-level relative error.
    assert jnp.allclose(y, y_ref, atol=2e-3, rtol=2e-3), float(
        jnp.max(jnp.abs(y - y_ref))
    )

    print("KERNEL_OK")
</pallas_src>

<mosaic_0001>
module attributes {stable_mosaic.version = 11 : i64} {
  func.func @_fused_attention_kernel(%arg0: i32, %arg1: memref<1x8x32xf32, #tpu.memory_space<vmem>>, %arg2: memref<32x96xf32, #tpu.memory_space<vmem>>, %arg3: memref<32x32xf32, #tpu.memory_space<vmem>>, %arg4: memref<1x32xf32, #tpu.memory_space<vmem>>, %arg5: memref<1x8x32xf32, #tpu.memory_space<vmem>>) attributes {dimension_semantics = [#tpu.dimension_semantics<parallel>], iteration_bounds = array<i64: 2>, scalar_prefetch = 0 : i64, scratch_operands = 0 : i64, tpu.core_type = #tpu.core_type<tc>, window_params = [{transform_indices = @transform_0, window_bounds = array<i64: 1, 8, 32>}, {pipeline_mode = #tpu.pipeline_mode<synchronous>, transform_indices = @transform_1, window_bounds = array<i64: 32, 96>}, {pipeline_mode = #tpu.pipeline_mode<synchronous>, transform_indices = @transform_2, window_bounds = array<i64: 32, 32>}, {pipeline_mode = #tpu.pipeline_mode<synchronous>, transform_indices = @transform_3, window_bounds = array<i64: 1, 32>}, {transform_indices = @transform_4, window_bounds = array<i64: 1, 8, 32>}]} {
    %c0 = arith.constant 0 : index
    %c0_0 = arith.constant 0 : index
    %c0_1 = arith.constant 0 : index
    %0 = vector.load %arg1[%c0, %c0_0, %c0_1] : memref<1x8x32xf32, #tpu.memory_space<vmem>>, vector<1x8x32xf32>
    %1 = vector.shape_cast %0 : vector<1x8x32xf32> to vector<8x32xf32>
    %c0_2 = arith.constant 0 : index
    %c0_3 = arith.constant 0 : index
    %2 = vector.load %arg2[%c0_2, %c0_3] : memref<32x96xf32, #tpu.memory_space<vmem>>, vector<32x96xf32>
    %c0_4 = arith.constant 0 : index
    %c0_5 = arith.constant 0 : index
    %3 = vector.load %arg3[%c0_4, %c0_5] : memref<32x32xf32, #tpu.memory_space<vmem>>, vector<32x32xf32>
    %cst = arith.constant dense<0.000000e+00> : vector<8x96xf32>
    %4 = tpu.matmul %1, %2, %cst {dimension_numbers = #tpu.dot_dimension_numbers<[1], [0], [0], [1], [0, 0, 1, 1], [], []>} : vector<8x32xf32>, vector<32x96xf32>, vector<8x96xf32> -> vector<8x96xf32>
    %c0_6 = arith.constant 0 : index
    %c0_7 = arith.constant 0 : index
    %5 = vector.load %arg4[%c0_6, %c0_7] : memref<1x32xf32, #tpu.memory_space<vmem>>, vector<1x32xf32>
    %6 = vector.shape_cast %5 : vector<1x32xf32> to vector<1x32xf32>
    %7 = vector.broadcast %6 : vector<1x32xf32> to vector<8x32xf32>
    %8 = vector.extract_strided_slice %4 {offsets = [0, 0], sizes = [8, 8], strides = [1, 1]} : vector<8x96xf32> to vector<8x8xf32>
    %cst_8 = arith.constant 0.353553385 : f32
    %9 = vector.broadcast %cst_8 : f32 to vector<8x8xf32>
    %10 = arith.mulf %8, %9 : vector<8x8xf32>
    %11 = vector.extract_strided_slice %4 {offsets = [0, 32], sizes = [8, 8], strides = [1, 1]} : vector<8x96xf32> to vector<8x8xf32>
    %12 = vector.extract_strided_slice %4 {offsets = [0, 64], sizes = [8, 8], strides = [1, 1]} : vector<8x96xf32> to vector<8x8xf32>
    %cst_9 = arith.constant dense<0.000000e+00> : vector<8x8xf32>
    %13 = tpu.matmul %10, %11, %cst_9 {dimension_numbers = #tpu.dot_dimension_numbers<[1], [1], [0], [0], [0, 0, 1, 0], [], []>} : vector<8x8xf32>, vector<8x8xf32>, vector<8x8xf32> -> vector<8x8xf32>
    %cst_10 = arith.constant dense<0xFF800000> : vector<8xf32>
    %14 = vector.multi_reduction <maximumf>, %13, %cst_10 [1] : vector<8x8xf32> to vector<8xf32>
    %15 = vector.shape_cast %14 : vector<8xf32> to vector<8x1xf32>
    %16 = vector.broadcast %15 : vector<8x1xf32> to vector<8x8xf32>
    %17 = arith.subf %13, %16 : vector<8x8xf32>
    %18 = math.exp %17 : vector<8x8xf32>
    %cst_11 = arith.constant dense<0.000000e+00> : vector<8xf32>
    %19 = vector.multi_reduction <add>, %18, %cst_11 [1] : vector<8x8xf32> to vector<8xf32>
    %20 = vector.shape_cast %19 : vector<8xf32> to vector<8x1xf32>
    %21 = tpu.reciprocal %20 {approx = true} : vector<8x1xf32> -> vector<8x1xf32>
    %22 = vector.broadcast %21 : vector<8x1xf32> to vector<8x8xf32>
    %23 = arith.mulf %18, %22 : vector<8x8xf32>
    %cst_12 = arith.constant dense<0.000000e+00> : vector<8x8xf32>
    %24 = tpu.matmul %23, %12, %cst_12 {dimension_numbers = #tpu.dot_dimension_numbers<[1], [0], [0], [1], [0, 0, 1, 1], [], []>} : vector<8x8xf32>, vector<8x8xf32>, vector<8x8xf32> -> vector<8x8xf32>
    %25 = vector.extract_strided_slice %3 {offsets = [0, 0], sizes = [8, 32], strides = [1, 1]} : vector<32x32xf32> to vector<8x32xf32>
    %cst_13 = arith.constant dense<0.000000e+00> : vector<8x32xf32>
    %26 = tpu.matmul %24, %25, %cst_13 {dimension_numbers = #tpu.dot_dimension_numbers<[1], [0], [0], [1], [0, 0, 1, 1], [], []>} : vector<8x8xf32>, vector<8x32xf32>, vector<8x32xf32> -> vector<8x32xf32>
    %27 = arith.addf %7, %26 : vector<8x32xf32>
    %28 = vector.extract_strided_slice %4 {offsets = [0, 8], sizes = [8, 8], strides = [1, 1]} : vector<8x96xf32> to vector<8x8xf32>
    %cst_14 = arith.constant 0.353553385 : f32
    %29 = vector.broadcast %cst_14 : f32 to vector<8x8xf32>
    %30 = arith.mulf %28, %29 : vector<8x8xf32>
    %31 = vector.extract_strided_slice %4 {offsets = [0, 40], sizes = [8, 8], strides = [1, 1]} : vector<8x96xf32> to vector<8x8xf32>
    %32 = vector.extract_strided_slice %4 {offsets = [0, 72], sizes = [8, 8], strides = [1, 1]} : vector<8x96xf32> to vector<8x8xf32>
    %cst_15 = arith.constant dense<0.000000e+00> : vector<8x8xf32>
    %33 = tpu.matmul %30, %31, %cst_15 {dimension_numbers = #tpu.dot_dimension_numbers<[1], [1], [0], [0], [0, 0, 1, 0], [], []>} : vector<8x8xf32>, vector<8x8xf32>, vector<8x8xf32> -> vector<8x8xf32>
    %cst_16 = arith.constant dense<0xFF800000> : vector<8xf32>
    %34 = vector.multi_reduction <maximumf>, %33, %cst_16 [1] : vector<8x8xf32> to vector<8xf32>
    %35 = vector.shape_cast %34 : vector<8xf32> to vector<8x1xf32>
    %36 = vector.broadcast %35 : vector<8x1xf32> to vector<8x8xf32>
    %37 = arith.subf %33, %36 : vector<8x8xf32>
    %38 = math.exp %37 : vector<8x8xf32>
    %cst_17 = arith.constant dense<0.000000e+00> : vector<8xf32>
    %39 = vector.multi_reduction <add>, %38, %cst_17 [1] : vector<8x8xf32> to vector<8xf32>
    %40 = vector.shape_cast %39 : vector<8xf32> to vector<8x1xf32>
    %41 = tpu.reciprocal %40 {approx = true} : vector<8x1xf32> -> vector<8x1xf32>
    %42 = vector.broadcast %41 : vector<8x1xf32> to vector<8x8xf32>
    %43 = arith.mulf %38, %42 : vector<8x8xf32>
    %cst_18 = arith.constant dense<0.000000e+00> : vector<8x8xf32>
    %44 = tpu.matmul %43, %32, %cst_18 {dimension_numbers = #tpu.dot_dimension_numbers<[1], [0], [0], [1], [0, 0, 1, 1], [], []>} : vector<8x8xf32>, vector<8x8xf32>, vector<8x8xf32> -> vector<8x8xf32>
    %45 = vector.extract_strided_slice %3 {offsets = [8, 0], sizes = [8, 32], strides = [1, 1]} : vector<32x32xf32> to vector<8x32xf32>
    %cst_19 = arith.constant dense<0.000000e+00> : vector<8x32xf32>
    %46 = tpu.matmul %44, %45, %cst_19 {dimension_numbers = #tpu.dot_dimension_numbers<[1], [0], [0], [1], [0, 0, 1, 1], [], []>} : vector<8x8xf32>, vector<8x32xf32>, vector<8x32xf32> -> vector<8x32xf32>
    %47 = arith.addf %27, %46 : vector<8x32xf32>
    %48 = vector.extract_strided_slice %4 {offsets = [0, 16], sizes = [8, 8], strides = [1, 1]} : vector<8x96xf32> to vector<8x8xf32>
    %cst_20 = arith.constant 0.353553385 : f32
    %49 = vector.broadcast %cst_20 : f32 to vector<8x8xf32>
    %50 = arith.mulf %48, %49 : vector<8x8xf32>
    %51 = vector.extract_strided_slice %4 {offsets = [0, 48], sizes = [8, 8], strides = [1, 1]} : vector<8x96xf32> to vector<8x8xf32>
    %52 = vector.extract_strided_slice %4 {offsets = [0, 80], sizes = [8, 8], strides = [1, 1]} : vector<8x96xf32> to vector<8x8xf32>
    %cst_21 = arith.constant dense<0.000000e+00> : vector<8x8xf32>
    %53 = tpu.matmul %50, %51, %cst_21 {dimension_numbers = #tpu.dot_dimension_numbers<[1], [1], [0], [0], [0, 0, 1, 0], [], []>} : vector<8x8xf32>, vector<8x8xf32>, vector<8x8xf32> -> vector<8x8xf32>
    %cst_22 = arith.constant dense<0xFF800000> : vector<8xf32>
    %54 = vector.multi_reduction <maximumf>, %53, %cst_22 [1] : vector<8x8xf32> to vector<8xf32>
    %55 = vector.shape_cast %54 : vector<8xf32> to vector<8x1xf32>
    %56 = vector.broadcast %55 : vector<8x1xf32> to vector<8x8xf32>
    %57 = arith.subf %53, %56 : vector<8x8xf32>
    %58 = math.exp %57 : vector<8x8xf32>
    %cst_23 = arith.constant dense<0.000000e+00> : vector<8xf32>
    %59 = vector.multi_reduction <add>, %58, %cst_23 [1] : vector<8x8xf32> to vector<8xf32>
    %60 = vector.shape_cast %59 : vector<8xf32> to vector<8x1xf32>
    %61 = tpu.reciprocal %60 {approx = true} : vector<8x1xf32> -> vector<8x1xf32>
    %62 = vector.broadcast %61 : vector<8x1xf32> to vector<8x8xf32>
    %63 = arith.mulf %58, %62 : vector<8x8xf32>
    %cst_24 = arith.constant dense<0.000000e+00> : vector<8x8xf32>
    %64 = tpu.matmul %63, %52, %cst_24 {dimension_numbers = #tpu.dot_dimension_numbers<[1], [0], [0], [1], [0, 0, 1, 1], [], []>} : vector<8x8xf32>, vector<8x8xf32>, vector<8x8xf32> -> vector<8x8xf32>
    %65 = vector.extract_strided_slice %3 {offsets = [16, 0], sizes = [8, 32], strides = [1, 1]} : vector<32x32xf32> to vector<8x32xf32>
    %cst_25 = arith.constant dense<0.000000e+00> : vector<8x32xf32>
    %66 = tpu.matmul %64, %65, %cst_25 {dimension_numbers = #tpu.dot_dimension_numbers<[1], [0], [0], [1], [0, 0, 1, 1], [], []>} : vector<8x8xf32>, vector<8x32xf32>, vector<8x32xf32> -> vector<8x32xf32>
    %67 = arith.addf %47, %66 : vector<8x32xf32>
    %68 = vector.extract_strided_slice %4 {offsets = [0, 24], sizes = [8, 8], strides = [1, 1]} : vector<8x96xf32> to vector<8x8xf32>
    %cst_26 = arith.constant 0.353553385 : f32
    %69 = vector.broadcast %cst_26 : f32 to vector<8x8xf32>
    %70 = arith.mulf %68, %69 : vector<8x8xf32>
    %71 = vector.extract_strided_slice %4 {offsets = [0, 56], sizes = [8, 8], strides = [1, 1]} : vector<8x96xf32> to vector<8x8xf32>
    %72 = vector.extract_strided_slice %4 {offsets = [0, 88], sizes = [8, 8], strides = [1, 1]} : vector<8x96xf32> to vector<8x8xf32>
    %cst_27 = arith.constant dense<0.000000e+00> : vector<8x8xf32>
    %73 = tpu.matmul %70, %71, %cst_27 {dimension_numbers = #tpu.dot_dimension_numbers<[1], [1], [0], [0], [0, 0, 1, 0], [], []>} : vector<8x8xf32>, vector<8x8xf32>, vector<8x8xf32> -> vector<8x8xf32>
    %cst_28 = arith.constant dense<0xFF800000> : vector<8xf32>
    %74 = vector.multi_reduction <maximumf>, %73, %cst_28 [1] : vector<8x8xf32> to vector<8xf32>
    %75 = vector.shape_cast %74 : vector<8xf32> to vector<8x1xf32>
    %76 = vector.broadcast %75 : vector<8x1xf32> to vector<8x8xf32>
    %77 = arith.subf %73, %76 : vector<8x8xf32>
    %78 = math.exp %77 : vector<8x8xf32>
    %cst_29 = arith.constant dense<0.000000e+00> : vector<8xf32>
    %79 = vector.multi_reduction <add>, %78, %cst_29 [1] : vector<8x8xf32> to vector<8xf32>
    %80 = vector.shape_cast %79 : vector<8xf32> to vector<8x1xf32>
    %81 = tpu.reciprocal %80 {approx = true} : vector<8x1xf32> -> vector<8x1xf32>
    %82 = vector.broadcast %81 : vector<8x1xf32> to vector<8x8xf32>
    %83 = arith.mulf %78, %82 : vector<8x8xf32>
    %cst_30 = arith.constant dense<0.000000e+00> : vector<8x8xf32>
    %84 = tpu.matmul %83, %72, %cst_30 {dimension_numbers = #tpu.dot_dimension_numbers<[1], [0], [0], [1], [0, 0, 1, 1], [], []>} : vector<8x8xf32>, vector<8x8xf32>, vector<8x8xf32> -> vector<8x8xf32>
    %85 = vector.extract_strided_slice %3 {offsets = [24, 0], sizes = [8, 32], strides = [1, 1]} : vector<32x32xf32> to vector<8x32xf32>
    %cst_31 = arith.constant dense<0.000000e+00> : vector<8x32xf32>
    %86 = tpu.matmul %84, %85, %cst_31 {dimension_numbers = #tpu.dot_dimension_numbers<[1], [0], [0], [1], [0, 0, 1, 1], [], []>} : vector<8x8xf32>, vector<8x32xf32>, vector<8x32xf32> -> vector<8x32xf32>
    %87 = arith.addf %67, %86 : vector<8x32xf32>
    %c0_32 = arith.constant 0 : index
    %c0_33 = arith.constant 0 : index
    %c0_34 = arith.constant 0 : index
    %88 = vector.load %arg5[%c0_32, %c0_33, %c0_34] : memref<1x8x32xf32, #tpu.memory_space<vmem>>, vector<1x8x32xf32>
    %89 = vector.shape_cast %88 : vector<1x8x32xf32> to vector<8x32xf32>
    %90 = vector.shape_cast %87 : vector<8x32xf32> to vector<1x8x32xf32>
    tpu.vector_store %arg5[%c0_32, %c0_33, %c0_34], %90 {strides = array<i32>} : memref<1x8x32xf32, #tpu.memory_space<vmem>>, vector<1x8x32xf32>,
    return
  }
  func.func @transform_0(%arg0: i32) -> (i32, i32, i32) {
    %c0_i32 = arith.constant 0 : i32
    %c0_i32_0 = arith.constant 0 : i32
    %c0_i32_1 = arith.constant 0 : i32
    return %arg0, %c0_i32, %c0_i32_0 : i32, i32, i32
  }
  func.func @transform_1(%arg0: i32) -> (i32, i32) {
    %c0_i32 = arith.constant 0 : i32
    %c0_i32_0 = arith.constant 0 : i32
    %c0_i32_1 = arith.constant 0 : i32
    return %c0_i32, %c0_i32_0 : i32, i32
  }
  func.func @transform_2(%arg0: i32) -> (i32, i32) {
    %c0_i32 = arith.constant 0 : i32
    %c0_i32_0 = arith.constant 0 : i32
    %c0_i32_1 = arith.constant 0 : i32
    return %c0_i32, %c0_i32_0 : i32, i32
  }
  func.func @transform_3(%arg0: i32) -> (i32, i32) {
    %c0_i32 = arith.constant 0 : i32
    %c0_i32_0 = arith.constant 0 : i32
    %c0_i32_1 = arith.constant 0 : i32
    return %c0_i32, %c0_i32_0 : i32, i32
  }
  func.func @transform_4(%arg0: i32) -> (i32, i32, i32) {
    %c0_i32 = arith.constant 0 : i32
    %c0_i32_0 = arith.constant 0 : i32
    %c0_i32_1 = arith.constant 0 : i32
    return %arg0, %c0_i32, %c0_i32_0 : i32, i32, i32
  }
}

</mosaic_0001>

<llo_original>
// kernel: tpu_custom_call.1
$region0: #{tpu_custom_call.1}
  #allocation0 [shape = 'u32[]', space=smem, size = 0x4, offset = 0x4, fixed_abs, tag = 'smem constant byte address 0x4 - core index']
  #allocation1 [shape = 'u32[144,128]{1,0:T(1,128)}', space=vmem, size = 0x12000, scoped, tag = 'internal scratch']
  %s0 = inlined_call_operand.hbm [shape: f32[2,8,32], index: 0, kind: input, shape index: {}]
  %s1 = inlined_call_operand.hbm [shape: f32[32,96], index: 1, kind: input, shape index: {}]
  %s2 = inlined_call_operand.hbm [shape: f32[32,32], index: 2, kind: input, shape index: {}]
  %s3 = inlined_call_operand.vmem [shape: f32[1,32], index: 3, kind: input, shape index: {}]
  %s4 = inlined_call_operand.hbm [shape: f32[2,8,32], index: 4, kind: output, shape index: {}]
  %s5 = sld [smem:[#allocation0]]
  $region61: #{tpu_custom_call.1} parent=0
    _
  %s7 = ssub.s32 1, %s5
  %s8 = scalar_select 0, %s7, %s5
  $region1: #{tpu_custom_call.1} parent=0
    #allocation2 [shape = 'u8[8192]{0}', space=vmem, size = 0x2000, scoped, tag = 'input window, operand 0']
    #allocation3 [shape = 's32[2]{0}', space=sflag, size = 0x8, scoped, tag = 'scoped memory for tpu_custom_call.1']
    #allocation4 [shape = 's32[2]{0}', space=sflag, size = 0x8, scoped, tag = 'scoped memory for tpu_custom_call.1']
    #allocation5 [shape = 'u8[16384]{0}', space=vmem, size = 0x4000, scoped, tag = 'input window, operand 1, single buffered']
    #allocation6 [shape = 's32[1]{0}', space=sflag, size = 0x4, scoped, tag = 'scoped memory for tpu_custom_call.1']
    #allocation7 [shape = 'u8[16384]{0}', space=vmem, size = 0x4000, scoped, tag = 'input window, operand 2, single buffered']
    #allocation8 [shape = 'u8[8192]{0}', space=vmem, size = 0x2000, scoped, tag = 'output window, operand 0']
    %9 = vsyncpa [#allocation3], 0
    %s10 = scalar_lea.sflag [#allocation3], 1
    %11 = vsyncpa %s10, 0
    %12 = vsyncpa [#allocation6], 0
    %13 = vsyncpa [#allocation4], 0
    %s14 = scalar_lea.sflag [#allocation4], 1
    %15 = vsyncpa %s14, 0
    loop: start=0, step=1, limit=4
    $region2: #{tpu_custom_call.1} parent=1 // loop_pre_header
      _
    $region3: #{tpu_custom_call.1} parent=1 // loop_header
      %s17 = sphi 0, %s21
      %p18 = scmp.ge.s32.totalorder %s17, 4
      %s27 = sphi 0, %s29
      %s30 = sphi 0, %s27
      %s31 = sphi 0, %s30
      %s47 = sphi 0, %s31
      %s51 = sphi 0, %s51
      %s53 = sphi 0, %s51
      %s54 = sphi 0, %s53
      %s68 = sphi 0, %s54
      %s72 = sphi 0, %s72
      %s74 = sphi 0, %s72
      %s75 = sphi 0, %s74
      %s89 = sphi 0, %s75
      %s93 = sphi 0, %s93
      %s95 = sphi 0, %s93
      %s96 = sphi 0, %s95
      %s110 = sphi 0, %s96
      %s116 = sphi 0, %s118
      %s119 = sphi 0, %s116
      %s120 = sphi 0, %s119
      %s136 = sphi 0, %s120
    $region4: #{tpu_custom_call.1} parent=1 // loop_header_branch
      %20 = sbr.rel (%p18) target = $region8
    $region5: #{tpu_custom_call.1} parent=1 // loop_body
      %s22 = ssub.s32 %s17, 1
      %s23 = ssub.s32 %s17, 2
      %s24 = sadd.s32 %s17, 1
      %s25 = ssub.s32 %s17, %s24
      %p26 = scmp.eq.s32.totalorder %s25, 0
      %s28 = sadd.s32 %s27, 1
      %s29 = scalar_select %p26, %s27, %s28
      %p32 = pneg %p26
      %p33 = scmp.eq.s32.totalorder %s17, 1
      %p34 = por %p32, %p33
      %p35 = scmp.ne.s32.totalorder %s27, %s30
      %p36 = scmp.eq.s32.totalorder %s17, 0
      %p37 = por %p35, %p36
      %p38 = scmp.ne.s32.totalorder %s27, %s30
      %p39 = scmp.eq.s32.totalorder %s22, 1
      %p40 = por %p38, %p39
      %p41 = scmp.ne.s32.totalorder %s30, %s31
      %p42 = scmp.eq.s32.totalorder %s22, 0
      %p43 = por %p41, %p42
      %p44 = scmp.ne.s32.totalorder %s30, %s31
      %p45 = scmp.eq.s32.totalorder %s23, 1
      %p46 = por %p44, %p45
      %p48 = scmp.ne.s32.totalorder %s31, %s47
      %p49 = scmp.eq.s32.totalorder %s23, 0
      %p50 = por %p48, %p49
      %s52 = sadd.s32 %s51, 1
      %p55 = scmp.eq.s32.totalorder %s17, 1
      %p56 = scmp.ne.s32.totalorder %s51, %s53
      %p57 = scmp.eq.s32.totalorder %s17, 0
      %p58 = por %p56, %p57
      %p59 = scmp.ne.s32.totalorder %s51, %s53
      %p60 = scmp.eq.s32.totalorder %s22, 1
      %p61 = por %p59, %p60
      %p62 = scmp.ne.s32.totalorder %s53, %s54
      %p63 = scmp.eq.s32.totalorder %s22, 0
      %p64 = por %p62, %p63
      %p65 = scmp.ne.s32.totalorder %s53, %s54
      %p66 = scmp.eq.s32.totalorder %s23, 1
      %p67 = por %p65, %p66
      %p69 = scmp.ne.s32.totalorder %s54, %s68
      %p70 = scmp.eq.s32.totalorder %s23, 0
      %p71 = por %p69, %p70
      %s73 = sadd.s32 %s72, 1
      %p76 = scmp.eq.s32.totalorder %s17, 1
      %p77 = scmp.ne.s32.totalorder %s72, %s74
      %p78 = scmp.eq.s32.totalorder %s17, 0
      %p79 = por %p77, %p78
      %p80 = scmp.ne.s32.totalorder %s72, %s74
      %p81 = scmp.eq.s32.totalorder %s22, 1
      %p82 = por %p80, %p81
      %p83 = scmp.ne.s32.totalorder %s74, %s75
      %p84 = scmp.eq.s32.totalorder %s22, 0
      %p85 = por %p83, %p84
      %p86 = scmp.ne.s32.totalorder %s74, %s75
      %p87 = scmp.eq.s32.totalorder %s23, 1
      %p88 = por %p86, %p87
      %p90 = scmp.ne.s32.totalorder %s75, %s89
      %p91 = scmp.eq.s32.totalorder %s23, 0
      %p92 = por %p90, %p91
      %s94 = sadd.s32 %s93, 1
      %p97 = scmp.eq.s32.totalorder %s17, 1
      %p98 = scmp.ne.s32.totalorder %s93, %s95
      %p99 = scmp.eq.s32.totalorder %s17, 0
      %p100 = por %p98, %p99
      %p101 = scmp.ne.s32.totalorder %s93, %s95
      %p102 = scmp.eq.s32.totalorder %s22, 1
      %p103 = por %p101, %p102
      %p104 = scmp.ne.s32.totalorder %s95, %s96
      %p105 = scmp.eq.s32.totalorder %s22, 0
      %p106 = por %p104, %p105
      %p107 = scmp.ne.s32.totalorder %s95, %s96
      %p108 = scmp.eq.s32.totalorder %s23, 1
      %p109 = por %p107, %p108
      %p111 = scmp.ne.s32.totalorder %s96, %s110
      %p112 = scmp.eq.s32.totalorder %s23, 0
      %p113 = por %p111, %p112
      %s114 = ssub.s32 %s17, %s24
      %p115 = scmp.eq.s32.totalorder %s114, 0
      %s117 = sadd.s32 %s116, 1
      %s118 = scalar_select %p115, %s116, %s117
      %p121 = pneg %p115
      %p122 = scmp.eq.s32.totalorder %s17, 1
      %p123 = por %p121, %p122
      %p124 = scmp.ne.s32.totalorder %s116, %s119
      %p125 = scmp.eq.s32.totalorder %s17, 0
      %p126 = por %p124, %p125
      %p127 = scmp.ne.s32.totalorder %s116, %s119
      %p128 = scmp.eq.s32.totalorder %s22, 1
      %p129 = por %p127, %p128
      %p130 = scmp.ne.s32.totalorder %s119, %s120
      %p131 = scmp.eq.s32.totalorder %s22, 0
      %p132 = por %p130, %p131
      %p133 = scmp.ne.s32.totalorder %s119, %s120
      %p134 = scmp.eq.s32.totalorder %s23, 1
      %p135 = por %p133, %p134
      %p137 = scmp.ne.s32.totalorder %s120, %s136
      %p138 = scmp.eq.s32.totalorder %s23, 0
      %p139 = por %p137, %p138
      %p140 = scmp.le.s32.totalorder 1, %s17
      %p141 = scmp.lt.s32.totalorder %s17, 3
      %p142 = pnand %p140, %p141
      %p143 = pneg %p142
      // Predicated region
      $region9: #{tpu_custom_call.1} parent=5 // pred_check
        _
      $region10: #{tpu_custom_call.1} parent=5 // pred_check_branch
        %145 = sbr.rel (%p142) target = $region12
      $region11: #{tpu_custom_call.1} parent=5 // pred_region
        %s146 = ssub.s32 %s17, 1
        // Predicated region
        $region13: #{tpu_custom_call.1} parent=11 // pred_check
          %p147 = pneg %p64
        $region14: #{tpu_custom_call.1} parent=11 // pred_check_branch
          %149 = sbr.rel (%p147) target = $region16
        $region15: #{tpu_custom_call.1} parent=11 // pred_region
          %s151 = ssub.s32 512, 512
          %152 = vsyncadd [#allocation6], %s151
          %s153 = sshll.u32 [#allocation5], 4
          %s154 = int_to_ptr.vmem [resolvable:$true] %s153
          %159 = dma.hbm_to_vmem [thread:$0]  %s1, 512, %s154, [#allocation6], 128, 128, 8
        $region16: #{tpu_custom_call.1} parent=11 // pred_fallthru
          _
        // Predicated region
        $region17: #{tpu_custom_call.1} parent=11 // pred_check
          %p160 = pneg %p85
        $region18: #{tpu_custom_call.1} parent=11 // pred_check_branch
          %162 = sbr.rel (%p160) target = $region20
        $region19: #{tpu_custom_call.1} parent=11 // pred_region
          %s164 = ssub.s32 512, 512
          %165 = vsyncadd [#allocation6], %s164
          %s166 = sshll.u32 [#allocation7], 4
          %s167 = int_to_ptr.vmem [resolvable:$true] %s166
          %172 = dma.hbm_to_vmem [thread:$0]  %s2, 512, %s167, [#allocation6], 128, 128, 8
        $region20: #{tpu_custom_call.1} parent=11 // pred_fallthru
          _
        // Predicated region
        $region21: #{tpu_custom_call.1} parent=11 // pred_check
          %p173 = pneg %p106
        $region22: #{tpu_custom_call.1} parent=11 // pred_check_branch
          %175 = sbr.rel (%p173) target = $region24
        $region23: #{tpu_custom_call.1} parent=11 // pred_region
          _
        $region24: #{tpu_custom_call.1} parent=11 // pred_fallthru
          _
      $region12: #{tpu_custom_call.1} parent=5 // pred_fallthru
        _
      %p176 = scmp.lt.s32.totalorder %s17, 2
      // Predicated region
      $region25: #{tpu_custom_call.1} parent=5 // pred_check
        %p177 = pneg %p176
      $region26: #{tpu_custom_call.1} parent=5 // pred_check_branch
        %179 = sbr.rel (%p177) target = $region28
      $region27: #{tpu_custom_call.1} parent=5 // pred_region
        // Predicated region
        $region29: #{tpu_custom_call.1} parent=27 // pred_check
          %p180 = pneg %p37
        $region30: #{tpu_custom_call.1} parent=27 // pred_check_branch
          %182 = sbr.rel (%p180) target = $region32
        $region31: #{tpu_custom_call.1} parent=27 // pred_region
          %s183 = sand.u32 %s27, 1
          %s184 = scalar_lea.sflag [#allocation3], %s183
          %s185 = sand.u32 %s27, 1
          %s186 = smul.addr %s185, 8
          %s187 = scalar_lea.vmem [#allocation2], %s186
          %s189 = ssub.s32 128, 128
          %190 = vsyncadd %s184, %s189
          %s191 = smul.addr %s17, 128
          %s192 = scalar_lea.hbm %s0, %s191
          %s194 = sshll.u32 %s187, 4
          %s195 = int_to_ptr.vmem [resolvable:$true] %s194
          %197 = dma.hbm_to_vmem [thread:$0]  %s192, 128, %s195, %s184
        $region32: #{tpu_custom_call.1} parent=27 // pred_fallthru
          _
      $region28: #{tpu_custom_call.1} parent=5 // pred_fallthru
        _
      %p198 = scmp.le.s32.totalorder 1, %s17
      %p199 = scmp.lt.s32.totalorder %s17, 3
      %p200 = pnand %p198, %p199
      %p201 = pneg %p200
      // Predicated region
      $region33: #{tpu_custom_call.1} parent=5 // pred_check
        _
      $region34: #{tpu_custom_call.1} parent=5 // pred_check_branch
        %203 = sbr.rel (%p200) target = $region36
      $region35: #{tpu_custom_call.1} parent=5 // pred_region
        %s204 = ssub.s32 %s17, 1
        %s205 = sand.u32 %s30, 1
        %s206 = scalar_lea.sflag [#allocation3], %s205
        %s207 = sand.u32 %s30, 1
        %s208 = smul.addr %s207, 8
        %s209 = scalar_lea.vmem [#allocation2], %s208
        // Predicated region
        $region37: #{tpu_custom_call.1} parent=35 // pred_check
          %p210 = pneg %p43
        $region38: #{tpu_custom_call.1} parent=35 // pred_check_branch
          %212 = sbr.rel (%p210) target = $region40
        $region39: #{tpu_custom_call.1} parent=35 // pred_region
          %213 = dma.done %s206, 128
        $region40: #{tpu_custom_call.1} parent=35 // pred_fallthru
          _
        // Predicated region
        $region41: #{tpu_custom_call.1} parent=35 // pred_check
          %p214 = pneg %p64
        $region42: #{tpu_custom_call.1} parent=35 // pred_check_branch
          %216 = sbr.rel (%p214) target = $region44
        $region43: #{tpu_custom_call.1} parent=35 // pred_region
          %217 = dma.done [#allocation6], 512
        $region44: #{tpu_custom_call.1} parent=35 // pred_fallthru
          _
        // Predicated region
        $region45: #{tpu_custom_call.1} parent=35 // pred_check
          %p218 = pneg %p85
        $region46: #{tpu_custom_call.1} parent=35 // pred_check_branch
          %220 = sbr.rel (%p218) target = $region48
        $region47: #{tpu_custom_call.1} parent=35 // pred_region
          %221 = dma.done [#allocation6], 512
        $region48: #{tpu_custom_call.1} parent=35 // pred_fallthru
          _
        %s222 = sand.u32 %s30, 1
        %s223 = scalar_lea.sflag [#allocation3], %s222
        %s224 = sand.u32 %s30, 1
        %s225 = smul.addr %s224, 8
        %s226 = scalar_lea.vmem [#allocation2], %s225
        %p227 = pneg %p43
        %p228 = pneg %p40
        %p229 = pneg %p64
        %p230 = pneg %p61
        %p231 = pneg %p85
        %p232 = pneg %p82
        %p233 = pneg %p106
        %p234 = pneg %p103
        %p235 = pneg %p132
        %p236 = pneg %p129
        %s237 = sand.u32 %s119, 1
        %s238 = scalar_lea.sflag [#allocation4], %s237
        %s239 = sand.u32 %s119, 1
        %s240 = smul.addr %s239, 8
        %s241 = scalar_lea.vmem [#allocation8], %s240
        %v242 = vld [vmem:[%s209] sm:$0xff]
        %v243 = vld [vmem:[#allocation5] sm:$0xff]
        %v244 = vld [vmem:[#allocation5 + $0x8] sm:$0xff]
        %v245 = vld [vmem:[#allocation5 + $0x10] sm:$0xff]
        %v246 = vld [vmem:[#allocation5 + $0x18] sm:$0xff]
        %v247 = vld [vmem:[#allocation7] sm:$0xff]
        %v248 = vld [vmem:[#allocation7 + $0x8] sm:$0xff]
        %v249 = vld [vmem:[#allocation7 + $0x10] sm:$0xff]
        %v250 = vld [vmem:[#allocation7 + $0x18] sm:$0xff]
        %vm251 = vcmask 261120
        %v253 = vsel %vm251, %v242, 0
        %255 = vmatprep.subr.mxu0 0.0
        %256 = vmatpush1.msra.mxu0 %v243
        %257 = vmatprep.subr.mxu0 0.0
        %258 = vmatpush1.msra.mxu0 %v244
        %259 = vmatprep.subr.mxu0 0.0
        %260 = vmatpush1.msra.mxu0 %v245
        %261 = vmatprep.subr.mxu0 0.0
        %262 = vmatpush1.msra.mxu0 %v246
        %263 = vmatprep.subr.mxu0 0.0
        %264 = vmatpush1.msra.mxu0 0.0
        %265 = vmatprep.subr.mxu0 0.0
        %266 = vmatpush1.msra.mxu0 0.0
        %267 = vmatprep.subr.mxu0 0.0
        %268 = vmatpush1.msra.mxu0 0.0
        %269 = vmatprep.subr.mxu0 0.0
        %270 = vmatpush1.msra.mxu0 0.0
        %271 = vmatprep.subr.mxu0 0.0
        %272 = vmatpush1.msra.mxu0 0.0
        %273 = vmatprep.subr.mxu0 0.0
        %274 = vmatpush1.msra.mxu0 0.0
        %275 = vmatprep.subr.mxu0 0.0
        %276 = vmatpush1.msra.mxu0 0.0
        %277 = vmatprep.subr.mxu0 0.0
        %278 = vmatpush1.msra.mxu0 0.0
        %279 = vmatprep.subr.mxu0 0.0
        %280 = vmatpush1.msra.mxu0 0.0
        %281 = vmatprep.subr.mxu0 0.0
        %282 = vmatpush1.msra.mxu0 0.0
        %283 = vmatprep.subr.mxu0 0.0
        %284 = vmatpush1.msra.mxu0 0.0
        %285 = vmatprep.subr.mxu0 0.0
        %286 = vmatpush1.msra.mxu0 0.0
        %287 = vmatprep.subr.mxu0 0.0
        %288 = vmatpush1.msra.mxu0 0.0
        %289 = vmatprep.subr.mxu0 0.0
        %290 = vmatpush1.msra.mxu0 0.0
        %291 = vmatprep.subr.mxu0 0.0
        %292 = vmatpush1.msra.mxu0 0.0
        %293 = vmatprep.subr.mxu0 0.0
        %294 = vmatpush1.msra.mxu0 0.0
        %295 = vmatprep.subr.mxu0 0.0
        %296 = vmatpush1.msra.mxu0 0.0
        %297 = vmatprep.subr.mxu0 0.0
        %298 = vmatpush1.msra.mxu0 0.0
        %299 = vmatprep.subr.mxu0 0.0
        %300 = vmatpush1.msra.mxu0 0.0
        %301 = vmatprep.subr.mxu0 0.0
        %302 = vmatpush1.msra.mxu0 0.0
        %303 = vmatprep.subr.mxu0 0.0
        %304 = vmatpush1.msra.mxu0 0.0
        %305 = vmatprep.subr.mxu0 0.0
        %306 = vmatpush1.msra.mxu0 0.0
        %307 = vmatprep.subr.mxu0 0.0
        %308 = vmatpush1.msra.mxu0 0.0
        %309 = vmatprep.subr.mxu0 0.0
        %310 = vmatpush1.msra.mxu0 0.0
        %311 = vmatprep.subr.mxu0 0.0
        %312 = vmatpush1.msra.mxu0 0.0
        %313 = vmatprep.subr.mxu0 0.0
        %314 = vmatpush1.msra.mxu0 0.0
        %315 = vmatprep.subr.mxu0 0.0
        %316 = vmatpush1.msra.mxu0 0.0
        %317 = vmatprep.subr.mxu0 0.0
        %318 = vmatpush1.msra.mxu0 0.0
        %319 = vmatprep.mubr.f32.mxu0 0.0
        %320 = vmatmul.mubr.f32.gmra.mrb[0].mxu0 %v253
        %v321 = vpop.f32.mrb[0].mxu0
        %v322 = vadd.f32 0.0, %v321
        %v323 = vpop.f32.mrb[0].mxu0
        %324 = vdwg.mxu0
        %v325 = vld [vmem:[%s3] sm:$0x1]
        %v327 = vlaneseq
        %v328 = vshrl.u32 %v327, 7
        %v329 = vsub.s32 0, %v328
        %v330 = vrot.slane %v325, %v329
        %v332 = vmul.f32 %v322, 0.35355338
        %334 = vrot.lane.b32.xlu0 %v322, 96
        %v335 = vpop.permute.xlu0 %334
        %vm336 = vcmask 64512
        %v338 = vsel %vm336, %v332, 0
        %v340 = vsel %vm336, %v335, 0
        %342 = vmatprep.subr.mxu0 0.0
        %343 = vmatpush1.xpose.msra.mxu0 %v340
        %344 = vmatprep.subr.mxu0 0.0
        %345 = vmatpush1.xpose.msra.mxu0 0.0
        %346 = vmatprep.subr.mxu0 0.0
        %347 = vmatpush1.xpose.msra.mxu0 0.0
        %348 = vmatprep.subr.mxu0 0.0
        %349 = vmatpush1.xpose.msra.mxu0 0.0
        %350 = vmatprep.subr.mxu0 0.0
        %351 = vmatpush1.xpose.msra.mxu0 0.0
        %352 = vmatprep.subr.mxu0 0.0
        %353 = vmatpush1.xpose.msra.mxu0 0.0
        %354 = vmatprep.subr.mxu0 0.0
        %355 = vmatpush1.xpose.msra.mxu0 0.0
        %356 = vmatprep.subr.mxu0 0.0
        %357 = vmatpush1.xpose.msra.mxu0 0.0
        %358 = vmatprep.subr.mxu0 0.0
        %359 = vmatpush1.xpose.msra.mxu0 0.0
        %360 = vmatprep.subr.mxu0 0.0
        %361 = vmatpush1.xpose.msra.mxu0 0.0
        %362 = vmatprep.subr.mxu0 0.0
        %363 = vmatpush1.xpose.msra.mxu0 0.0
        %364 = vmatprep.subr.mxu0 0.0
        %365 = vmatpush1.xpose.msra.mxu0 0.0
        %366 = vmatprep.subr.mxu0 0.0
        %367 = vmatpush1.xpose.msra.mxu0 0.0
        %368 = vmatprep.subr.mxu0 0.0
        %369 = vmatpush1.xpose.msra.mxu0 0.0
        %370 = vmatprep.subr.mxu0 0.0
        %371 = vmatpush1.xpose.msra.mxu0 0.0
        %372 = vmatprep.subr.mxu0 0.0
        %373 = vmatpush1.xpose.msra.mxu0 0.0
        %374 = vmatprep.subr.mxu0 0.0
        %375 = vmatpush1.xpose.msra.mxu0 0.0
        %376 = vmatprep.subr.mxu0 0.0
        %377 = vmatpush1.xpose.msra.mxu0 0.0
        %378 = vmatprep.subr.mxu0 0.0
        %379 = vmatpush1.xpose.msra.mxu0 0.0
        %380 = vmatprep.subr.mxu0 0.0
        %381 = vmatpush1.xpose.msra.mxu0 0.0
        %382 = vmatprep.subr.mxu0 0.0
        %383 = vmatpush1.xpose.msra.mxu0 0.0
        %384 = vmatprep.subr.mxu0 0.0
        %385 = vmatpush1.xpose.msra.mxu0 0.0
        %386 = vmatprep.subr.mxu0 0.0
        %387 = vmatpush1.xpose.msra.mxu0 0.0
        %388 = vmatprep.subr.mxu0 0.0
        %389 = vmatpush1.xpose.msra.mxu0 0.0
        %390 = vmatprep.subr.mxu0 0.0
        %391 = vmatpush1.xpose.msra.mxu0 0.0
        %392 = vmatprep.subr.mxu0 0.0
        %393 = vmatpush1.xpose.msra.mxu0 0.0
        %394 = vmatprep.subr.mxu0 0.0
        %395 = vmatpush1.xpose.msra.mxu0 0.0
        %396 = vmatprep.subr.mxu0 0.0
        %397 = vmatpush1.xpose.msra.mxu0 0.0
        %398 = vmatprep.subr.mxu0 0.0
        %399 = vmatpush1.xpose.msra.mxu0 0.0
        %400 = vmatprep.subr.mxu0 0.0
        %401 = vmatpush1.xpose.msra.mxu0 0.0
        %402 = vmatprep.subr.mxu0 0.0
        %403 = vmatpush1.xpose.msra.mxu0 0.0
        %404 = vmatprep.subr.mxu0 0.0
        %405 = vmatpush1.xpose.msra.mxu0 0.0
        %406 = vmatprep.mubr.f32.mxu0 0.0
        %407 = vmatmul.mubr.f32.gmra.mrb[0].mxu0 %v338
        %v408 = vpop.f32.mrb[0].mxu0
        %v409 = vadd.f32 0.0, %v408
        %v410 = vpop.f32.mrb[0].mxu0
        %411 = vdwg.mxu0
        %v412 = vsel %vm336, %v409, -inf
        %413 = vmax.xlane.f32.xlu0 %v412
        %v414 = vpop.xlane.xlu0 %413
        %v415 = vsub.f32 %v409, %v414
        %v416 = vmul.f32 %v415, 1.442695
        %v417 = vpow.pop %v416
        %v418 = vsel %vm336, %v417, 0.0
        %419 = vadd.xlane.f32.xlu0 %v418
        %v420 = vpop.xlane.xlu0 %419
        %v421 = vrcp.pop %v420
        %v422 = vmul.f32 %v417, %v421
        %423 = vrot.lane.b32.xlu0 %v322, 64
        %v424 = vpop.permute.xlu0 %423
        %v427 = vsel %vm336, %v422, 0
        %429 = vmatprep.subr.mxu0 0.0
        %430 = vmatpush1.msra.mxu0 %v424
        %431 = vmatprep.subr.mxu0 0.0
        %432 = vmatpush1.msra.mxu0 0.0
        %433 = vmatprep.subr.mxu0 0.0
        %434 = vmatpush1.msra.mxu0 0.0
        %435 = vmatprep.subr.mxu0 0.0
        %436 = vmatpush1.msra.mxu0 0.0
        %437 = vmatprep.subr.mxu0 0.0
        %438 = vmatpush1.msra.mxu0 0.0
        %439 = vmatprep.subr.mxu0 0.0
        %440 = vmatpush1.msra.mxu0 0.0
        %441 = vmatprep.subr.mxu0 0.0
        %442 = vmatpush1.msra.mxu0 0.0
        %443 = vmatprep.subr.mxu0 0.0
        %444 = vmatpush1.msra.mxu0 0.0
        %445 = vmatprep.subr.mxu0 0.0
        %446 = vmatpush1.msra.mxu0 0.0
        %447 = vmatprep.subr.mxu0 0.0
        %448 = vmatpush1.msra.mxu0 0.0
        %449 = vmatprep.subr.mxu0 0.0
        %450 = vmatpush1.msra.mxu0 0.0
        %451 = vmatprep.subr.mxu0 0.0
        %452 = vmatpush1.msra.mxu0 0.0
        %453 = vmatprep.subr.mxu0 0.0
        %454 = vmatpush1.msra.mxu0 0.0
        %455 = vmatprep.subr.mxu0 0.0
        %456 = vmatpush1.msra.mxu0 0.0
        %457 = vmatprep.subr.mxu0 0.0
        %458 = vmatpush1.msra.mxu0 0.0
        %459 = vmatprep.subr.mxu0 0.0
        %460 = vmatpush1.msra.mxu0 0.0
        %461 = vmatprep.subr.mxu0 0.0
        %462 = vmatpush1.msra.mxu0 0.0
        %463 = vmatprep.subr.mxu0 0.0
        %464 = vmatpush1.msra.mxu0 0.0
        %465 = vmatprep.subr.mxu0 0.0
        %466 = vmatpush1.msra.mxu0 0.0
        %467 = vmatprep.subr.mxu0 0.0
        %468 = vmatpush1.msra.mxu0 0.0
        %469 = vmatprep.subr.mxu0 0.0
        %470 = vmatpush1.msra.mxu0 0.0
        %471 = vmatprep.subr.mxu0 0.0
        %472 = vmatpush1.msra.mxu0 0.0
        %473 = vmatprep.subr.mxu0 0.0
        %474 = vmatpush1.msra.mxu0 0.0
        %475 = vmatprep.subr.mxu0 0.0
        %476 = vmatpush1.msra.mxu0 0.0
        %477 = vmatprep.subr.mxu0 0.0
        %478 = vmatpush1.msra.mxu0 0.0
        %479 = vmatprep.subr.mxu0 0.0
        %480 = vmatpush1.msra.mxu0 0.0
        %481 = vmatprep.subr.mxu0 0.0
        %482 = vmatpush1.msra.mxu0 0.0
        %483 = vmatprep.subr.mxu0 0.0
        %484 = vmatpush1.msra.mxu0 0.0
        %485 = vmatprep.subr.mxu0 0.0
        %486 = vmatpush1.msra.mxu0 0.0
        %487 = vmatprep.subr.mxu0 0.0
        %488 = vmatpush1.msra.mxu0 0.0
        %489 = vmatprep.subr.mxu0 0.0
        %490 = vmatpush1.msra.mxu0 0.0
        %491 = vmatprep.subr.mxu0 0.0
        %492 = vmatpush1.msra.mxu0 0.0
        %493 = vmatprep.mubr.f32.mxu0 0.0
        %494 = vmatmul.mubr.f32.gmra.mrb[0].mxu0 %v427
        %v495 = vpop.f32.mrb[0].mxu0
        %v496 = vadd.f32 0.0, %v495
        %v497 = vpop.f32.mrb[0].mxu0
        %498 = vdwg.mxu0
        %v500 = vsel %vm336, %v496, 0
        %502 = vmatprep.subr.mxu0 0.0
        %503 = vmatpush1.msra.mxu0 %v247
        %504 = vmatprep.subr.mxu0 0.0
        %505 = vmatpush1.msra.mxu0 0.0
        %506 = vmatprep.subr.mxu0 0.0
        %507 = vmatpush1.msra.mxu0 0.0
        %508 = vmatprep.subr.mxu0 0.0
        %509 = vmatpush1.msra.mxu0 0.0
        %510 = vmatprep.subr.mxu0 0.0
        %511 = vmatpush1.msra.mxu0 0.0
        %512 = vmatprep.subr.mxu0 0.0
        %513 = vmatpush1.msra.mxu0 0.0
        %514 = vmatprep.subr.mxu0 0.0
        %515 = vmatpush1.msra.mxu0 0.0
        %516 = vmatprep.subr.mxu0 0.0
        %517 = vmatpush1.msra.mxu0 0.0
        %518 = vmatprep.subr.mxu0 0.0
        %519 = vmatpush1.msra.mxu0 0.0
        %520 = vmatprep.subr.mxu0 0.0
        %521 = vmatpush1.msra.mxu0 0.0
        %522 = vmatprep.subr.mxu0 0.0
        %523 = vmatpush1.msra.mxu0 0.0
        %524 = vmatprep.subr.mxu0 0.0
        %525 = vmatpush1.msra.mxu0 0.0
        %526 = vmatprep.subr.mxu0 0.0
        %527 = vmatpush1.msra.mxu0 0.0
        %528 = vmatprep.subr.mxu0 0.0
        %529 = vmatpush1.msra.mxu0 0.0
        %530 = vmatprep.subr.mxu0 0.0
        %531 = vmatpush1.msra.mxu0 0.0
        %532 = vmatprep.subr.mxu0 0.0
        %533 = vmatpush1.msra.mxu0 0.0
        %534 = vmatprep.subr.mxu0 0.0
        %535 = vmatpush1.msra.mxu0 0.0
        %536 = vmatprep.subr.mxu0 0.0
        %537 = vmatpush1.msra.mxu0 0.0
        %538 = vmatprep.subr.mxu0 0.0
        %539 = vmatpush1.msra.mxu0 0.0
        %540 = vmatprep.subr.mxu0 0.0
        %541 = vmatpush1.msra.mxu0 0.0
        %542 = vmatprep.subr.mxu0 0.0
        %543 = vmatpush1.msra.mxu0 0.0
        %544 = vmatprep.subr.mxu0 0.0
        %545 = vmatpush1.msra.mxu0 0.0
        %546 = vmatprep.subr.mxu0 0.0
        %547 = vmatpush1.msra.mxu0 0.0
        %548 = vmatprep.subr.mxu0 0.0
        %549 = vmatpush1.msra.mxu0 0.0
        %550 = vmatprep.subr.mxu0 0.0
        %551 = vmatpush1.msra.mxu0 0.0
        %552 = vmatprep.subr.mxu0 0.0
        %553 = vmatpush1.msra.mxu0 0.0
        %554 = vmatprep.subr.mxu0 0.0
        %555 = vmatpush1.msra.mxu0 0.0
        %556 = vmatprep.subr.mxu0 0.0
        %557 = vmatpush1.msra.mxu0 0.0
        %558 = vmatprep.subr.mxu0 0.0
        %559 = vmatpush1.msra.mxu0 0.0
        %560 = vmatprep.subr.mxu0 0.0
        %561 = vmatpush1.msra.mxu0 0.0
        %562 = vmatprep.subr.mxu0 0.0
        %563 = vmatpush1.msra.mxu0 0.0
        %564 = vmatprep.subr.mxu0 0.0
        %565 = vmatpush1.msra.mxu0 0.0
        %566 = vmatprep.mubr.f32.mxu0 0.0
        %567 = vmatmul.mubr.f32.gmra.mrb[0].mxu0 %v500
        %v568 = vpop.f32.mrb[0].mxu0
        %v569 = vadd.f32 0.0, %v568
        %v570 = vpop.f32.mrb[0].mxu0
        %571 = vdwg.mxu0
        %v572 = vadd.f32 %v330, %v569
        %573 = vrot.lane.b32.xlu0 %v332, 120
        %v574 = vpop.permute.xlu0 %573
        %575 = vrot.lane.b32.xlu0 %v322, 88
        %v576 = vpop.permute.xlu0 %575
        %v577 = vsel %vm336, %v574, 0
        %v579 = vsel %vm336, %v576, 0
        %581 = vmatprep.subr.mxu0 0.0
        %582 = vmatpush1.xpose.msra.mxu0 %v579
        %583 = vmatprep.subr.mxu0 0.0
        %584 = vmatpush1.xpose.msra.mxu0 0.0
        %585 = vmatprep.subr.mxu0 0.0
        %586 = vmatpush1.xpose.msra.mxu0 0.0
        %587 = vmatprep.subr.mxu0 0.0
        %588 = vmatpush1.xpose.msra.mxu0 0.0
        %589 = vmatprep.subr.mxu0 0.0
        %590 = vmatpush1.xpose.msra.mxu0 0.0
        %591 = vmatprep.subr.mxu0 0.0
        %592 = vmatpush1.xpose.msra.mxu0 0.0
        %593 = vmatprep.subr.mxu0 0.0
        %594 = vmatpush1.xpose.msra.mxu0 0.0
        %595 = vmatprep.subr.mxu0 0.0
        %596 = vmatpush1.xpose.msra.mxu0 0.0
        %597 = vmatprep.subr.mxu0 0.0
        %598 = vmatpush1.xpose.msra.mxu0 0.0
        %599 = vmatprep.subr.mxu0 0.0
        %600 = vmatpush1.xpose.msra.mxu0 0.0
        %601 = vmatprep.subr.mxu0 0.0
        %602 = vmatpush1.xpose.msra.mxu0 0.0
        %603 = vmatprep.subr.mxu0 0.0
        %604 = vmatpush1.xpose.msra.mxu0 0.0
        %605 = vmatprep.subr.mxu0 0.0
        %606 = vmatpush1.xpose.msra.mxu0 0.0
        %607 = vmatprep.subr.mxu0 0.0
        %608 = vmatpush1.xpose.msra.mxu0 0.0
        %609 = vmatprep.subr.mxu0 0.0
        %610 = vmatpush1.xpose.msra.mxu0 0.0
        %611 = vmatprep.subr.mxu0 0.0
        %612 = vmatpush1.xpose.msra.mxu0 0.0
        %613 = vmatprep.subr.mxu0 0.0
        %614 = vmatpush1.xpose.msra.mxu0 0.0
        %615 = vmatprep.subr.mxu0 0.0
        %616 = vmatpush1.xpose.msra.mxu0 0.0
        %617 = vmatprep.subr.mxu0 0.0
        %618 = vmatpush1.xpose.msra.mxu0 0.0
        %619 = vmatprep.subr.mxu0 0.0
        %620 = vmatpush1.xpose.msra.mxu0 0.0
        %621 = vmatprep.subr.mxu0 0.0
        %622 = vmatpush1.xpose.msra.mxu0 0.0
        %623 = vmatprep.subr.mxu0 0.0
        %624 = vmatpush1.xpose.msra.mxu0 0.0
        %625 = vmatprep.subr.mxu0 0.0
        %626 = vmatpush1.xpose.msra.mxu0 0.0
        %627 = vmatprep.subr.mxu0 0.0
        %628 = vmatpush1.xpose.msra.mxu0 0.0
        %629 = vmatprep.subr.mxu0 0.0
        %630 = vmatpush1.xpose.msra.mxu0 0.0
        %631 = vmatprep.subr.mxu0 0.0
        %632 = vmatpush1.xpose.msra.mxu0 0.0
        %633 = vmatprep.subr.mxu0 0.0
        %634 = vmatpush1.xpose.msra.mxu0 0.0
        %635 = vmatprep.subr.mxu0 0.0
        %636 = vmatpush1.xpose.msra.mxu0 0.0
        %637 = vmatprep.subr.mxu0 0.0
        %638 = vmatpush1.xpose.msra.mxu0 0.0
        %639 = vmatprep.subr.mxu0 0.0
        %640 = vmatpush1.xpose.msra.mxu0 0.0
        %641 = vmatprep.subr.mxu0 0.0
        %642 = vmatpush1.xpose.msra.mxu0 0.0
        %643 = vmatprep.subr.mxu0 0.0
        %644 = vmatpush1.xpose.msra.mxu0 0.0
        %645 = vmatprep.mubr.f32.mxu0 0.0
        %646 = vmatmul.mubr.f32.gmra.mrb[0].mxu0 %v577
        %v647 = vpop.f32.mrb[0].mxu0
        %v648 = vadd.f32 0.0, %v647
        %v649 = vpop.f32.mrb[0].mxu0
        %650 = vdwg.mxu0
        %v651 = vsel %vm336, %v648, -inf
        %652 = vmax.xlane.f32.xlu0 %v651
        %v653 = vpop.xlane.xlu0 %652
        %v654 = vsub.f32 %v648, %v653
        %v655 = vmul.f32 %v654, 1.442695
        %v656 = vpow.pop %v655
        %v657 = vsel %vm336, %v656, 0.0
        %658 = vadd.xlane.f32.xlu0 %v657
        %v659 = vpop.xlane.xlu0 %658
        %v660 = vrcp.pop %v659
        %v661 = vmul.f32 %v656, %v660
        %662 = vrot.lane.b32.xlu0 %v322, 56
        %v663 = vpop.permute.xlu0 %662
        %v666 = vsel %vm336, %v661, 0
        %668 = vmatprep.subr.mxu0 0.0
        %669 = vmatpush1.msra.mxu0 %v663
        %670 = vmatprep.subr.mxu0 0.0
        %671 = vmatpush1.msra.mxu0 0.0
        %672 = vmatprep.subr.mxu0 0.0
        %673 = vmatpush1.msra.mxu0 0.0
        %674 = vmatprep.subr.mxu0 0.0
        %675 = vmatpush1.msra.mxu0 0.0
        %676 = vmatprep.subr.mxu0 0.0
        %677 = vmatpush1.msra.mxu0 0.0
        %678 = vmatprep.subr.mxu0 0.0
        %679 = vmatpush1.msra.mxu0 0.0
        %680 = vmatprep.subr.mxu0 0.0
        %681 = vmatpush1.msra.mxu0 0.0
        %682 = vmatprep.subr.mxu0 0.0
        %683 = vmatpush1.msra.mxu0 0.0
        %684 = vmatprep.subr.mxu0 0.0
        %685 = vmatpush1.msra.mxu0 0.0
        %686 = vmatprep.subr.mxu0 0.0
        %687 = vmatpush1.msra.mxu0 0.0
        %688 = vmatprep.subr.mxu0 0.0
        %689 = vmatpush1.msra.mxu0 0.0
        %690 = vmatprep.subr.mxu0 0.0
        %691 = vmatpush1.msra.mxu0 0.0
        %692 = vmatprep.subr.mxu0 0.0
        %693 = vmatpush1.msra.mxu0 0.0
        %694 = vmatprep.subr.mxu0 0.0
        %695 = vmatpush1.msra.mxu0 0.0
        %696 = vmatprep.subr.mxu0 0.0
        %697 = vmatpush1.msra.mxu0 0.0
        %698 = vmatprep.subr.mxu0 0.0
        %699 = vmatpush1.msra.mxu0 0.0
        %700 = vmatprep.subr.mxu0 0.0
        %701 = vmatpush1.msra.mxu0 0.0
        %702 = vmatprep.subr.mxu0 0.0
        %703 = vmatpush1.msra.mxu0 0.0
        %704 = vmatprep.subr.mxu0 0.0
        %705 = vmatpush1.msra.mxu0 0.0
        %706 = vmatprep.subr.mxu0 0.0
        %707 = vmatpush1.msra.mxu0 0.0
        %708 = vmatprep.subr.mxu0 0.0
        %709 = vmatpush1.msra.mxu0 0.0
        %710 = vmatprep.subr.mxu0 0.0
        %711 = vmatpush1.msra.mxu0 0.0
        %712 = vmatprep.subr.mxu0 0.0
        %713 = vmatpush1.msra.mxu0 0.0
        %714 = vmatprep.subr.mxu0 0.0
        %715 = vmatpush1.msra.mxu0 0.0
        %716 = vmatprep.subr.mxu0 0.0
        %717 = vmatpush1.msra.mxu0 0.0
        %718 = vmatprep.subr.mxu0 0.0
        %719 = vmatpush1.msra.mxu0 0.0
        %720 = vmatprep.subr.mxu0 0.0
        %721 = vmatpush1.msra.mxu0 0.0
        %722 = vmatprep.subr.mxu0 0.0
        %723 = vmatpush1.msra.mxu0 0.0
        %724 = vmatprep.subr.mxu0 0.0
        %725 = vmatpush1.msra.mxu0 0.0
        %726 = vmatprep.subr.mxu0 0.0
        %727 = vmatpush1.msra.mxu0 0.0
        %728 = vmatprep.subr.mxu0 0.0
        %729 = vmatpush1.msra.mxu0 0.0
        %730 = vmatprep.subr.mxu0 0.0
        %731 = vmatpush1.msra.mxu0 0.0
        %732 = vmatprep.mubr.f32.mxu0 0.0
        %733 = vmatmul.mubr.f32.gmra.mrb[0].mxu0 %v666
        %v734 = vpop.f32.mrb[0].mxu0
        %v735 = vadd.f32 0.0, %v734
        %v736 = vpop.f32.mrb[0].mxu0
        %737 = vdwg.mxu0
        %v739 = vsel %vm336, %v735, 0
        %741 = vmatprep.subr.mxu0 0.0
        %742 = vmatpush1.msra.mxu0 %v248
        %743 = vmatprep.subr.mxu0 0.0
        %744 = vmatpush1.msra.mxu0 0.0
        %745 = vmatprep.subr.mxu0 0.0
        %746 = vmatpush1.msra.mxu0 0.0
        %747 = vmatprep.subr.mxu0 0.0
        %748 = vmatpush1.msra.mxu0 0.0
        %749 = vmatprep.subr.mxu0 0.0
        %750 = vmatpush1.msra.mxu0 0.0
        %751 = vmatprep.subr.mxu0 0.0
        %752 = vmatpush1.msra.mxu0 0.0
        %753 = vmatprep.subr.mxu0 0.0
        %754 = vmatpush1.msra.mxu0 0.0
        %755 = vmatprep.subr.mxu0 0.0
        %756 = vmatpush1.msra.mxu0 0.0
        %757 = vmatprep.subr.mxu0 0.0
        %758 = vmatpush1.msra.mxu0 0.0
        %759 = vmatprep.subr.mxu0 0.0
        %760 = vmatpush1.msra.mxu0 0.0
        %761 = vmatprep.subr.mxu0 0.0
        %762 = vmatpush1.msra.mxu0 0.0
        %763 = vmatprep.subr.mxu0 0.0
        %764 = vmatpush1.msra.mxu0 0.0
        %765 = vmatprep.subr.mxu0 0.0
        %766 = vmatpush1.msra.mxu0 0.0
        %767 = vmatprep.subr.mxu0 0.0
        %768 = vmatpush1.msra.mxu0 0.0
        %769 = vmatprep.subr.mxu0 0.0
        %770 = vmatpush1.msra.mxu0 0.0
        %771 = vmatprep.subr.mxu0 0.0
        %772 = vmatpush1.msra.mxu0 0.0
        %773 = vmatprep.subr.mxu0 0.0
        %774 = vmatpush1.msra.mxu0 0.0
        %775 = vmatprep.subr.mxu0 0.0
        %776 = vmatpush1.msra.mxu0 0.0
        %777 = vmatprep.subr.mxu0 0.0
        %778 = vmatpush1.msra.mxu0 0.0
        %779 = vmatprep.subr.mxu0 0.0
        %780 = vmatpush1.msra.mxu0 0.0
        %781 = vmatprep.subr.mxu0 0.0
        %782 = vmatpush1.msra.mxu0 0.0
        %783 = vmatprep.subr.mxu0 0.0
        %784 = vmatpush1.msra.mxu0 0.0
        %785 = vmatprep.subr.mxu0 0.0
        %786 = vmatpush1.msra.mxu0 0.0
        %787 = vmatprep.subr.mxu0 0.0
        %788 = vmatpush1.msra.mxu0 0.0
        %789 = vmatprep.subr.mxu0 0.0
        %790 = vmatpush1.msra.mxu0 0.0
        %791 = vmatprep.subr.mxu0 0.0
        %792 = vmatpush1.msra.mxu0 0.0
        %793 = vmatprep.subr.mxu0 0.0
        %794 = vmatpush1.msra.mxu0 0.0
        %795 = vmatprep.subr.mxu0 0.0
        %796 = vmatpush1.msra.mxu0 0.0
        %797 = vmatprep.subr.mxu0 0.0
        %798 = vmatpush1.msra.mxu0 0.0
        %799 = vmatprep.subr.mxu0 0.0
        %800 = vmatpush1.msra.mxu0 0.0
        %801 = vmatprep.subr.mxu0 0.0
        %802 = vmatpush1.msra.mxu0 0.0
        %803 = vmatprep.subr.mxu0 0.0
        %804 = vmatpush1.msra.mxu0 0.0
        %805 = vmatprep.mubr.f32.mxu0 0.0
        %806 = vmatmul.mubr.f32.gmra.mrb[0].mxu0 %v739
        %v807 = vpop.f32.mrb[0].mxu0
        %v808 = vadd.f32 0.0, %v807
        %v809 = vpop.f32.mrb[0].mxu0
        %810 = vdwg.mxu0
        %v811 = vadd.f32 %v572, %v808
        %812 = vrot.lane.b32.xlu0 %v332, 112
        %v813 = vpop.permute.xlu0 %812
        %814 = vrot.lane.b32.xlu0 %v322, 80
        %v815 = vpop.permute.xlu0 %814
        %v816 = vsel %vm336, %v813, 0
        %v818 = vsel %vm336, %v815, 0
        %820 = vmatprep.subr.mxu0 0.0
        %821 = vmatpush1.xpose.msra.mxu0 %v818
        %822 = vmatprep.subr.mxu0 0.0
        %823 = vmatpush1.xpose.msra.mxu0 0.0
        %824 = vmatprep.subr.mxu0 0.0
        %825 = vmatpush1.xpose.msra.mxu0 0.0
        %826 = vmatprep.subr.mxu0 0.0
        %827 = vmatpush1.xpose.msra.mxu0 0.0
        %828 = vmatprep.subr.mxu0 0.0
        %829 = vmatpush1.xpose.msra.mxu0 0.0
        %830 = vmatprep.subr.mxu0 0.0
        %831 = vmatpush1.xpose.msra.mxu0 0.0
        %832 = vmatprep.subr.mxu0 0.0
        %833 = vmatpush1.xpose.msra.mxu0 0.0
        %834 = vmatprep.subr.mxu0 0.0
        %835 = vmatpush1.xpose.msra.mxu0 0.0
        %836 = vmatprep.subr.mxu0 0.0
        %837 = vmatpush1.xpose.msra.mxu0 0.0
        %838 = vmatprep.subr.mxu0 0.0
        %839 = vmatpush1.xpose.msra.mxu0 0.0
        %840 = vmatprep.subr.mxu0 0.0
        %841 = vmatpush1.xpose.msra.mxu0 0.0
        %842 = vmatprep.subr.mxu0 0.0
        %843 = vmatpush1.xpose.msra.mxu0 0.0
        %844 = vmatprep.subr.mxu0 0.0
        %845 = vmatpush1.xpose.msra.mxu0 0.0
        %846 = vmatprep.subr.mxu0 0.0
        %847 = vmatpush1.xpose.msra.mxu0 0.0
        %848 = vmatprep.subr.mxu0 0.0
        %849 = vmatpush1.xpose.msra.mxu0 0.0
        %850 = vmatprep.subr.mxu0 0.0
        %851 = vmatpush1.xpose.msra.mxu0 0.0
        %852 = vmatprep.subr.mxu0 0.0
        %853 = vmatpush1.xpose.msra.mxu0 0.0
        %854 = vmatprep.subr.mxu0 0.0
        %855 = vmatpush1.xpose.msra.mxu0 0.0
        %856 = vmatprep.subr.mxu0 0.0
        %857 = vmatpush1.xpose.msra.mxu0 0.0
        %858 = vmatprep.subr.mxu0 0.0
        %859 = vmatpush1.xpose.msra.mxu0 0.0
        %860 = vmatprep.subr.mxu0 0.0
        %861 = vmatpush1.xpose.msra.mxu0 0.0
        %862 = vmatprep.subr.mxu0 0.0
        %863 = vmatpush1.xpose.msra.mxu0 0.0
        %864 = vmatprep.subr.mxu0 0.0
        %865 = vmatpush1.xpose.msra.mxu0 0.0
        %866 = vmatprep.subr.mxu0 0.0
        %867 = vmatpush1.xpose.msra.mxu0 0.0
        %868 = vmatprep.subr.mxu0 0.0
        %869 = vmatpush1.xpose.msra.mxu0 0.0
        %870 = vmatprep.subr.mxu0 0.0
        %871 = vmatpush1.xpose.msra.mxu0 0.0
        %872 = vmatprep.subr.mxu0 0.0
        %873 = vmatpush1.xpose.msra.mxu0 0.0
        %874 = vmatprep.subr.mxu0 0.0
        %875 = vmatpush1.xpose.msra.mxu0 0.0
        %876 = vmatprep.subr.mxu0 0.0
        %877 = vmatpush1.xpose.msra.mxu0 0.0
        %878 = vmatprep.subr.mxu0 0.0
        %879 = vmatpush1.xpose.msra.mxu0 0.0
        %880 = vmatprep.subr.mxu0 0.0
        %881 = vmatpush1.xpose.msra.mxu0 0.0
        %882 = vmatprep.subr.mxu0 0.0
        %883 = vmatpush1.xpose.msra.mxu0 0.0
        %884 = vmatprep.mubr.f32.mxu0 0.0
        %885 = vmatmul.mubr.f32.gmra.mrb[0].mxu0 %v816
        %v886 = vpop.f32.mrb[0].mxu0
        %v887 = vadd.f32 0.0, %v886
        %v888 = vpop.f32.mrb[0].mxu0
        %889 = vdwg.mxu0
        %v890 = vsel %vm336, %v887, -inf
        %891 = vmax.xlane.f32.xlu0 %v890
        %v892 = vpop.xlane.xlu0 %891
        %v893 = vsub.f32 %v887, %v892
        %v894 = vmul.f32 %v893, 1.442695
        %v895 = vpow.pop %v894
        %v896 = vsel %vm336, %v895, 0.0
        %897 = vadd.xlane.f32.xlu0 %v896
        %v898 = vpop.xlane.xlu0 %897
        %v899 = vrcp.pop %v898
        %v900 = vmul.f32 %v895, %v899
        %901 = vrot.lane.b32.xlu0 %v322, 48
        %v902 = vpop.permute.xlu0 %901
        %v905 = vsel %vm336, %v900, 0
        %907 = vmatprep.subr.mxu0 0.0
        %908 = vmatpush1.msra.mxu0 %v902
        %909 = vmatprep.subr.mxu0 0.0
        %910 = vmatpush1.msra.mxu0 0.0
        %911 = vmatprep.subr.mxu0 0.0
        %912 = vmatpush1.msra.mxu0 0.0
        %913 = vmatprep.subr.mxu0 0.0
        %914 = vmatpush1.msra.mxu0 0.0
        %915 = vmatprep.subr.mxu0 0.0
        %916 = vmatpush1.msra.mxu0 0.0
        %917 = vmatprep.subr.mxu0 0.0
        %918 = vmatpush1.msra.mxu0 0.0
        %919 = vmatprep.subr.mxu0 0.0
        %920 = vmatpush1.msra.mxu0 0.0
        %921 = vmatprep.subr.mxu0 0.0
        %922 = vmatpush1.msra.mxu0 0.0
        %923 = vmatprep.subr.mxu0 0.0
        %924 = vmatpush1.msra.mxu0 0.0
        %925 = vmatprep.subr.mxu0 0.0
        %926 = vmatpush1.msra.mxu0 0.0
        %927 = vmatprep.subr.mxu0 0.0
        %928 = vmatpush1.msra.mxu0 0.0
        %929 = vmatprep.subr.mxu0 0.0
        %930 = vmatpush1.msra.mxu0 0.0
        %931 = vmatprep.subr.mxu0 0.0
        %932 = vmatpush1.msra.mxu0 0.0
        %933 = vmatprep.subr.mxu0 0.0
        %934 = vmatpush1.msra.mxu0 0.0
        %935 = vmatprep.subr.mxu0 0.0
        %936 = vmatpush1.msra.mxu0 0.0
        %937 = vmatprep.subr.mxu0 0.0
        %938 = vmatpush1.msra.mxu0 0.0
        %939 = vmatprep.subr.mxu0 0.0
        %940 = vmatpush1.msra.mxu0 0.0
        %941 = vmatprep.subr.mxu0 0.0
        %942 = vmatpush1.msra.mxu0 0.0
        %943 = vmatprep.subr.mxu0 0.0
        %944 = vmatpush1.msra.mxu0 0.0
        %945 = vmatprep.subr.mxu0 0.0
        %946 = vmatpush1.msra.mxu0 0.0
        %947 = vmatprep.subr.mxu0 0.0
        %948 = vmatpush1.msra.mxu0 0.0
        %949 = vmatprep.subr.mxu0 0.0
        %950 = vmatpush1.msra.mxu0 0.0
        %951 = vmatprep.subr.mxu0 0.0
        %952 = vmatpush1.msra.mxu0 0.0
        %953 = vmatprep.subr.mxu0 0.0
        %954 = vmatpush1.msra.mxu0 0.0
        %955 = vmatprep.subr.mxu0 0.0
        %956 = vmatpush1.msra.mxu0 0.0
        %957 = vmatprep.subr.mxu0 0.0
        %958 = vmatpush1.msra.mxu0 0.0
        %959 = vmatprep.subr.mxu0 0.0
        %960 = vmatpush1.msra.mxu0 0.0
        %961 = vmatprep.subr.mxu0 0.0
        %962 = vmatpush1.msra.mxu0 0.0
        %963 = vmatprep.subr.mxu0 0.0
        %964 = vmatpush1.msra.mxu0 0.0
        %965 = vmatprep.subr.mxu0 0.0
        %966 = vmatpush1.msra.mxu0 0.0
        %967 = vmatprep.subr.mxu0 0.0
        %968 = vmatpush1.msra.mxu0 0.0
        %969 = vmatprep.subr.mxu0 0.0
        %970 = vmatpush1.msra.mxu0 0.0
        %971 = vmatprep.mubr.f32.mxu0 0.0
        %972 = vmatmul.mubr.f32.gmra.mrb[0].mxu0 %v905
        %v973 = vpop.f32.mrb[0].mxu0
        %v974 = vadd.f32 0.0, %v973
        %v975 = vpop.f32.mrb[0].mxu0
        %976 = vdwg.mxu0
        %v978 = vsel %vm336, %v974, 0
        %980 = vmatprep.subr.mxu0 0.0
        %981 = vmatpush1.msra.mxu0 %v249
        %982 = vmatprep.subr.mxu0 0.0
        %983 = vmatpush1.msra.mxu0 0.0
        %984 = vmatprep.subr.mxu0 0.0
        %985 = vmatpush1.msra.mxu0 0.0
        %986 = vmatprep.subr.mxu0 0.0
        %987 = vmatpush1.msra.mxu0 0.0
        %988 = vmatprep.subr.mxu0 0.0
        %989 = vmatpush1.msra.mxu0 0.0
        %990 = vmatprep.subr.mxu0 0.0
        %991 = vmatpush1.msra.mxu0 0.0
        %992 = vmatprep.subr.mxu0 0.0
        %993 = vmatpush1.msra.mxu0 0.0
        %994 = vmatprep.subr.mxu0 0.0
        %995 = vmatpush1.msra.mxu0 0.0
        %996 = vmatprep.subr.mxu0 0.0
        %997 = vmatpush1.msra.mxu0 0.0
        %998 = vmatprep.subr.mxu0 0.0
        %999 = vmatpush1.msra.mxu0 0.0
        %1000 = vmatprep.subr.mxu0 0.0
        %1001 = vmatpush1.msra.mxu0 0.0
        %1002 = vmatprep.subr.mxu0 0.0
        %1003 = vmatpush1.msra.mxu0 0.0
        %1004 = vmatprep.subr.mxu0 0.0
        %1005 = vmatpush1.msra.mxu0 0.0
        %1006 = vmatprep.subr.mxu0 0.0
        %1007 = vmatpush1.msra.mxu0 0.0
        %1008 = vmatprep.subr.mxu0 0.0
        %1009 = vmatpush1.msra.mxu0 0.0
        %1010 = vmatprep.subr.mxu0 0.0
        %1011 = vmatpush1.msra.mxu0 0.0
        %1012 = vmatprep.subr.mxu0 0.0
        %1013 = vmatpush1.msra.mxu0 0.0
        %1014 = vmatprep.subr.mxu0 0.0
        %1015 = vmatpush1.msra.mxu0 0.0
        %1016 = vmatprep.subr.mxu0 0.0
        %1017 = vmatpush1.msra.mxu0 0.0
        %1018 = vmatprep.subr.mxu0 0.0
        %1019 = vmatpush1.msra.mxu0 0.0
        %1020 = vmatprep.subr.mxu0 0.0
        %1021 = vmatpush1.msra.mxu0 0.0
        %1022 = vmatprep.subr.mxu0 0.0
        %1023 = vmatpush1.msra.mxu0 0.0
        %1024 = vmatprep.subr.mxu0 0.0
        %1025 = vmatpush1.msra.mxu0 0.0
        %1026 = vmatprep.subr.mxu0 0.0
        %1027 = vmatpush1.msra.mxu0 0.0
        %1028 = vmatprep.subr.mxu0 0.0
        %1029 = vmatpush1.msra.mxu0 0.0
        %1030 = vmatprep.subr.mxu0 0.0
        %1031 = vmatpush1.msra.mxu0 0.0
        %1032 = vmatprep.subr.mxu0 0.0
        %1033 = vmatpush1.msra.mxu0 0.0
        %1034 = vmatprep.subr.mxu0 0.0
        %1035 = vmatpush1.msra.mxu0 0.0
        %1036 = vmatprep.subr.mxu0 0.0
        %1037 = vmatpush1.msra.mxu0 0.0
        %1038 = vmatprep.subr.mxu0 0.0
        %1039 = vmatpush1.msra.mxu0 0.0
        %1040 = vmatprep.subr.mxu0 0.0
        %1041 = vmatpush1.msra.mxu0 0.0
        %1042 = vmatprep.subr.mxu0 0.0
        %1043 = vmatpush1.msra.mxu0 0.0
        %1044 = vmatprep.mubr.f32.mxu0 0.0
        %1045 = vmatmul.mubr.f32.gmra.mrb[0].mxu0 %v978
        %v1046 = vpop.f32.mrb[0].mxu0
        %v1047 = vadd.f32 0.0, %v1046
        %v1048 = vpop.f32.mrb[0].mxu0
        %1049 = vdwg.mxu0
        %v1050 = vadd.f32 %v811, %v1047
        %1051 = vrot.lane.b32.xlu0 %v332, 104
        %v1052 = vpop.permute.xlu0 %1051
        %1053 = vrot.lane.b32.xlu0 %v322, 72
        %v1054 = vpop.permute.xlu0 %1053
        %v1055 = vsel %vm336, %v1052, 0
        %v1057 = vsel %vm336, %v1054, 0
        %1059 = vmatprep.subr.mxu0 0.0
        %1060 = vmatpush1.xpose.msra.mxu0 %v1057
        %1061 = vmatprep.subr.mxu0 0.0
        %1062 = vmatpush1.xpose.msra.mxu0 0.0
        %1063 = vmatprep.subr.mxu0 0.0
        %1064 = vmatpush1.xpose.msra.mxu0 0.0
        %1065 = vmatprep.subr.mxu0 0.0
        %1066 = vmatpush1.xpose.msra.mxu0 0.0
        %1067 = vmatprep.subr.mxu0 0.0
        %1068 = vmatpush1.xpose.msra.mxu0 0.0
        %1069 = vmatprep.subr.mxu0 0.0
        %1070 = vmatpush1.xpose.msra.mxu0 0.0
        %1071 = vmatprep.subr.mxu0 0.0
        %1072 = vmatpush1.xpose.msra.mxu0 0.0
        %1073 = vmatprep.subr.mxu0 0.0
        %1074 = vmatpush1.xpose.msra.mxu0 0.0
        %1075 = vmatprep.subr.mxu0 0.0
        %1076 = vmatpush1.xpose.msra.mxu0 0.0
        %1077 = vmatprep.subr.mxu0 0.0
        %1078 = vmatpush1.xpose.msra.mxu0 0.0
        %1079 = vmatprep.subr.mxu0 0.0
        %1080 = vmatpush1.xpose.msra.mxu0 0.0
        %1081 = vmatprep.subr.mxu0 0.0
        %1082 = vmatpush1.xpose.msra.mxu0 0.0
        %1083 = vmatprep.subr.mxu0 0.0
        %1084 = vmatpush1.xpose.msra.mxu0 0.0
        %1085 = vmatprep.subr.mxu0 0.0
        %1086 = vmatpush1.xpose.msra.mxu0 0.0
        %1087 = vmatprep.subr.mxu0 0.0
        %1088 = vmatpush1.xpose.msra.mxu0 0.0
        %1089 = vmatprep.subr.mxu0 0.0
        %1090 = vmatpush1.xpose.msra.mxu0 0.0
        %1091 = vmatprep.subr.mxu0 0.0
        %1092 = vmatpush1.xpose.msra.mxu0 0.0
        %1093 = vmatprep.subr.mxu0 0.0
        %1094 = vmatpush1.xpose.msra.mxu0 0.0
        %1095 = vmatprep.subr.mxu0 0.0
        %1096 = vmatpush1.xpose.msra.mxu0 0.0
        %1097 = vmatprep.subr.mxu0 0.0
        %1098 = vmatpush1.xpose.msra.mxu0 0.0
        %1099 = vmatprep.subr.mxu0 0.0
        %1100 = vmatpush1.xpose.msra.mxu0 0.0
        %1101 = vmatprep.subr.mxu0 0.0
        %1102 = vmatpush1.xpose.msra.mxu0 0.0
        %1103 = vmatprep.subr.mxu0 0.0
        %1104 = vmatpush1.xpose.msra.mxu0 0.0
        %1105 = vmatprep.subr.mxu0 0.0
        %1106 = vmatpush1.xpose.msra.mxu0 0.0
        %1107 = vmatprep.subr.mxu0 0.0
        %1108 = vmatpush1.xpose.msra.mxu0 0.0
        %1109 = vmatprep.subr.mxu0 0.0
        %1110 = vmatpush1.xpose.msra.mxu0 0.0
        %1111 = vmatprep.subr.mxu0 0.0
        %1112 = vmatpush1.xpose.msra.mxu0 0.0
        %1113 = vmatprep.subr.mxu0 0.0
        %1114 = vmatpush1.xpose.msra.mxu0 0.0
        %1115 = vmatprep.subr.mxu0 0.0
        %1116 = vmatpush1.xpose.msra.mxu0 0.0
        %1117 = vmatprep.subr.mxu0 0.0
        %1118 = vmatpush1.xpose.msra.mxu0 0.0
        %1119 = vmatprep.subr.mxu0 0.0
        %1120 = vmatpush1.xpose.msra.mxu0 0.0
        %1121 = vmatprep.subr.mxu0 0.0
        %1122 = vmatpush1.xpose.msra.mxu0 0.0
        %1123 = vmatprep.mubr.f32.mxu0 0.0
        %1124 = vmatmul.mubr.f32.gmra.mrb[0].mxu0 %v1055
        %v1125 = vpop.f32.mrb[0].mxu0
        %v1126 = vadd.f32 0.0, %v1125
        %v1127 = vpop.f32.mrb[0].mxu0
        %1128 = vdwg.mxu0
        %v1129 = vsel %vm336, %v1126, -inf
        %1130 = vmax.xlane.f32.xlu0 %v1129
        %v1131 = vpop.xlane.xlu0 %1130
        %v1132 = vsub.f32 %v1126, %v1131
        %v1133 = vmul.f32 %v1132, 1.442695
        %v1134 = vpow.pop %v1133
        %v1135 = vsel %vm336, %v1134, 0.0
        %1136 = vadd.xlane.f32.xlu0 %v1135
        %v1137 = vpop.xlane.xlu0 %1136
        %v1138 = vrcp.pop %v1137
        %v1139 = vmul.f32 %v1134, %v1138
        %1140 = vrot.lane.b32.xlu0 %v322, 40
        %v1141 = vpop.permute.xlu0 %1140
        %v1144 = vsel %vm336, %v1139, 0
        %1146 = vmatprep.subr.mxu0 0.0
        %1147 = vmatpush1.msra.mxu0 %v1141
        %1148 = vmatprep.subr.mxu0 0.0
        %1149 = vmatpush1.msra.mxu0 0.0
        %1150 = vmatprep.subr.mxu0 0.0
        %1151 = vmatpush1.msra.mxu0 0.0
        %1152 = vmatprep.subr.mxu0 0.0
        %1153 = vmatpush1.msra.mxu0 0.0
        %1154 = vmatprep.subr.mxu0 0.0
        %1155 = vmatpush1.msra.mxu0 0.0
        %1156 = vmatprep.subr.mxu0 0.0
        %1157 = vmatpush1.msra.mxu0 0.0
        %1158 = vmatprep.subr.mxu0 0.0
        %1159 = vmatpush1.msra.mxu0 0.0
        %1160 = vmatprep.subr.mxu0 0.0
        %1161 = vmatpush1.msra.mxu0 0.0
        %1162 = vmatprep.subr.mxu0 0.0
        %1163 = vmatpush1.msra.mxu0 0.0
        %1164 = vmatprep.subr.mxu0 0.0
        %1165 = vmatpush1.msra.mxu0 0.0
        %1166 = vmatprep.subr.mxu0 0.0
        %1167 = vmatpush1.msra.mxu0 0.0
        %1168 = vmatprep.subr.mxu0 0.0
        %1169 = vmatpush1.msra.mxu0 0.0
        %1170 = vmatprep.subr.mxu0 0.0
        %1171 = vmatpush1.msra.mxu0 0.0
        %1172 = vmatprep.subr.mxu0 0.0
        %1173 = vmatpush1.msra.mxu0 0.0
        %1174 = vmatprep.subr.mxu0 0.0
        %1175 = vmatpush1.msra.mxu0 0.0
        %1176 = vmatprep.subr.mxu0 0.0
        %1177 = vmatpush1.msra.mxu0 0.0
        %1178 = vmatprep.subr.mxu0 0.0
        %1179 = vmatpush1.msra.mxu0 0.0
        %1180 = vmatprep.subr.mxu0 0.0
        %1181 = vmatpush1.msra.mxu0 0.0
        %1182 = vmatprep.subr.mxu0 0.0
        %1183 = vmatpush1.msra.mxu0 0.0
        %1184 = vmatprep.subr.mxu0 0.0
        %1185 = vmatpush1.msra.mxu0 0.0
        %1186 = vmatprep.subr.mxu0 0.0
        %1187 = vmatpush1.msra.mxu0 0.0
        %1188 = vmatprep.subr.mxu0 0.0
        %1189 = vmatpush1.msra.mxu0 0.0
        %1190 = vmatprep.subr.mxu0 0.0
        %1191 = vmatpush1.msra.mxu0 0.0
        %1192 = vmatprep.subr.mxu0 0.0
        %1193 = vmatpush1.msra.mxu0 0.0
        %1194 = vmatprep.subr.mxu0 0.0
        %1195 = vmatpush1.msra.mxu0 0.0
        %1196 = vmatprep.subr.mxu0 0.0
        %1197 = vmatpush1.msra.mxu0 0.0
        %1198 = vmatprep.subr.mxu0 0.0
        %1199 = vmatpush1.msra.mxu0 0.0
        %1200 = vmatprep.subr.mxu0 0.0
        %1201 = vmatpush1.msra.mxu0 0.0
        %1202 = vmatprep.subr.mxu0 0.0
        %1203 = vmatpush1.msra.mxu0 0.0
        %1204 = vmatprep.subr.mxu0 0.0
        %1205 = vmatpush1.msra.mxu0 0.0
        %1206 = vmatprep.subr.mxu0 0.0
        %1207 = vmatpush1.msra.mxu0 0.0
        %1208 = vmatprep.subr.mxu0 0.0
        %1209 = vmatpush1.msra.mxu0 0.0
        %1210 = vmatprep.mubr.f32.mxu0 0.0
        %1211 = vmatmul.mubr.f32.gmra.mrb[0].mxu0 %v1144
        %v1212 = vpop.f32.mrb[0].mxu0
        %v1213 = vadd.f32 0.0, %v1212
        %v1214 = vpop.f32.mrb[0].mxu0
        %1215 = vdwg.mxu0
        %v1217 = vsel %vm336, %v1213, 0
        %1219 = vmatprep.subr.mxu0 0.0
        %1220 = vmatpush1.msra.mxu0 %v250
        %1221 = vmatprep.subr.mxu0 0.0
        %1222 = vmatpush1.msra.mxu0 0.0
        %1223 = vmatprep.subr.mxu0 0.0
        %1224 = vmatpush1.msra.mxu0 0.0
        %1225 = vmatprep.subr.mxu0 0.0
        %1226 = vmatpush1.msra.mxu0 0.0
        %1227 = vmatprep.subr.mxu0 0.0
        %1228 = vmatpush1.msra.mxu0 0.0
        %1229 = vmatprep.subr.mxu0 0.0
        %1230 = vmatpush1.msra.mxu0 0.0
        %1231 = vmatprep.subr.mxu0 0.0
        %1232 = vmatpush1.msra.mxu0 0.0
        %1233 = vmatprep.subr.mxu0 0.0
        %1234 = vmatpush1.msra.mxu0 0.0
        %1235 = vmatprep.subr.mxu0 0.0
        %1236 = vmatpush1.msra.mxu0 0.0
        %1237 = vmatprep.subr.mxu0 0.0
        %1238 = vmatpush1.msra.mxu0 0.0
        %1239 = vmatprep.subr.mxu0 0.0
        %1240 = vmatpush1.msra.mxu0 0.0
        %1241 = vmatprep.subr.mxu0 0.0
        %1242 = vmatpush1.msra.mxu0 0.0
        %1243 = vmatprep.subr.mxu0 0.0
        %1244 = vmatpush1.msra.mxu0 0.0
        %1245 = vmatprep.subr.mxu0 0.0
        %1246 = vmatpush1.msra.mxu0 0.0
        %1247 = vmatprep.subr.mxu0 0.0
        %1248 = vmatpush1.msra.mxu0 0.0
        %1249 = vmatprep.subr.mxu0 0.0
        %1250 = vmatpush1.msra.mxu0 0.0
        %1251 = vmatprep.subr.mxu0 0.0
        %1252 = vmatpush1.msra.mxu0 0.0
        %1253 = vmatprep.subr.mxu0 0.0
        %1254 = vmatpush1.msra.mxu0 0.0
        %1255 = vmatprep.subr.mxu0 0.0
        %1256 = vmatpush1.msra.mxu0 0.0
        %1257 = vmatprep.subr.mxu0 0.0
        %1258 = vmatpush1.msra.mxu0 0.0
        %1259 = vmatprep.subr.mxu0 0.0
        %1260 = vmatpush1.msra.mxu0 0.0
        %1261 = vmatprep.subr.mxu0 0.0
        %1262 = vmatpush1.msra.mxu0 0.0
        %1263 = vmatprep.subr.mxu0 0.0
        %1264 = vmatpush1.msra.mxu0 0.0
        %1265 = vmatprep.subr.mxu0 0.0
        %1266 = vmatpush1.msra.mxu0 0.0
        %1267 = vmatprep.subr.mxu0 0.0
        %1268 = vmatpush1.msra.mxu0 0.0
        %1269 = vmatprep.subr.mxu0 0.0
        %1270 = vmatpush1.msra.mxu0 0.0
        %1271 = vmatprep.subr.mxu0 0.0
        %1272 = vmatpush1.msra.mxu0 0.0
        %1273 = vmatprep.subr.mxu0 0.0
        %1274 = vmatpush1.msra.mxu0 0.0
        %1275 = vmatprep.subr.mxu0 0.0
        %1276 = vmatpush1.msra.mxu0 0.0
        %1277 = vmatprep.subr.mxu0 0.0
        %1278 = vmatpush1.msra.mxu0 0.0
        %1279 = vmatprep.subr.mxu0 0.0
        %1280 = vmatpush1.msra.mxu0 0.0
        %1281 = vmatprep.subr.mxu0 0.0
        %1282 = vmatpush1.msra.mxu0 0.0
        %1283 = vmatprep.mubr.f32.mxu0 0.0
        %1284 = vmatmul.mubr.f32.gmra.mrb[0].mxu0 %v1217
        %v1285 = vpop.f32.mrb[0].mxu0
        %v1286 = vadd.f32 0.0, %v1285
        %v1287 = vpop.f32.mrb[0].mxu0
        %1288 = vdwg.mxu0
        %v1289 = vadd.f32 %v1050, %v1286
        %1290 = vst.msk [vmem:[%s241] sm:$0xff] %vm251, %v1289
        %s1291 = sand.u32 %s119, 1
        %s1292 = scalar_lea.sflag [#allocation4], %s1291
        %s1293 = sand.u32 %s119, 1
        %s1294 = smul.addr %s1293, 8
        %s1295 = scalar_lea.vmem [#allocation8], %s1294
        // Predicated region
        $region49: #{tpu_custom_call.1} parent=35 // pred_check
          %p1296 = pneg %p129
        $region50: #{tpu_custom_call.1} parent=35 // pred_check_branch
          %1298 = sbr.rel (%p1296) target = $region52
        $region51: #{tpu_custom_call.1} parent=35 // pred_region
          %s1300 = ssub.s32 128, 128
          %1301 = vsyncadd %s1292, %s1300
          %s1302 = smul.addr %s22, 128
          %s1303 = scalar_lea.hbm %s4, %s1302
          %s1305 = sshll.u32 %s1295, 4
          %s1306 = int_to_ptr.vmem [resolvable:$true] %s1305
          %1308 = dma.vmem_to_hbm [thread:$0]  %s1306, 128, %s1303, %s1292
        $region52: #{tpu_custom_call.1} parent=35 // pred_fallthru
          _
      $region36: #{tpu_custom_call.1} parent=5 // pred_fallthru
        _
      %p1309 = scmp.le.s32.totalorder 2, %s17
      // Predicated region
      $region53: #{tpu_custom_call.1} parent=5 // pred_check
        %p1310 = pneg %p1309
      $region54: #{tpu_custom_call.1} parent=5 // pred_check_branch
        %1312 = sbr.rel (%p1310) target = $region56
      $region55: #{tpu_custom_call.1} parent=5 // pred_region
        %s1313 = ssub.s32 %s17, 2
        // Predicated region
        $region57: #{tpu_custom_call.1} parent=55 // pred_check
          %p1314 = pneg %p135
        $region58: #{tpu_custom_call.1} parent=55 // pred_check_branch
          %1316 = sbr.rel (%p1314) target = $region60
        $region59: #{tpu_custom_call.1} parent=55 // pred_region
          %s1317 = sand.u32 %s120, 1
          %s1318 = scalar_lea.sflag [#allocation4], %s1317
          %s1319 = sand.u32 %s120, 1
          %s1320 = smul.addr %s1319, 8
          %s1321 = scalar_lea.vmem [#allocation8], %s1320
          %1322 = dma.done %s1318, 128
        $region60: #{tpu_custom_call.1} parent=55 // pred_fallthru
          _
      $region56: #{tpu_custom_call.1} parent=5 // pred_fallthru
        _
    $region6: #{tpu_custom_call.1} parent=1 // loop_footer
      %s21 = sadd.s32 1, %s17
    $region7: #{tpu_custom_call.1} parent=1 // loop_footer_branch
      %16 = sbr.rel target = $region3
    $region8: #{tpu_custom_call.1} parent=1 // loop_exit
      _
    %1323 = vsyncpa [#allocation3], 1
    %s1324 = scalar_lea.sflag [#allocation3], 1
    %1325 = vsyncpa %s1324, 1
    %1326 = vsyncpa [#allocation6], 1
    %1327 = vsyncpa [#allocation4], 1
    %s1328 = scalar_lea.sflag [#allocation4], 1
    %1329 = vsyncpa %s1328, 1

</llo_original>
